<compile_context>
chip_gen: v7x
topology: tpu7x:2x2x1
jax: 0.10.0
libtpu: 0.0.40
codegen_flags: <defaults>
</compile_context>

<pallas_src>
import numpy as np

import jax
import jax.numpy as jnp
from jax.experimental import pallas as pl
from jax.experimental.pallas import tpu as pltpu


def _round_up(x, m):
    return ((x + m - 1) // m) * m


# ----------------------------- padding (glue) --------------------------------

def _pad_nhwc(x, padding, pad_type):
    """Pads H and W dims of an NHWC tensor, matching the torch pad modules."""
    if padding == 0:
        return x
    p = padding
    if pad_type == "zero":
        return jnp.pad(x, ((0, 0), (p, p), (p, p), (0, 0)))
    if pad_type == "replicate":
        return jnp.pad(x, ((0, 0), (p, p), (p, p), (0, 0)), mode="edge")
    if pad_type == "reflect":
        return jnp.pad(x, ((0, 0), (p, p), (p, p), (0, 0)), mode="reflect")
    if pad_type == "spherical":
        # horizontal circular pad (prepend last p cols, append first p cols) ...
        x = jnp.concatenate([x[:, :, -p:, :], x, x[:, :, :p, :]], axis=2)
        # ... then vertical replicate pad.
        x = jnp.pad(x, ((0, 0), (p, p), (0, 0), (0, 0)), mode="edge")
        return x
    raise ValueError(f"Unsupported padding type: {pad_type}")


def _l2normalize(v, eps=1e-12):
    return v / (jnp.linalg.norm(v) + eps)


def _spectral_normalize(w, u, v, power_iterations=1):
    """Weight prep (glue), mirrors SpectralNorm._update_u_v."""
    h = w.shape[0]
    w2 = w.reshape(h, -1)
    for _ in range(power_iterations):
        v = _l2normalize(w2.T @ u)
        u = _l2normalize(w2 @ v)
    sigma = u @ (w2 @ v)
    return w / sigma


# ----------------------------- activations ------------------------------------

def _apply_activation(acc, activation, prelu_slope):
    if activation == "relu":
        return jnp.maximum(acc, 0.0)
    if activation == "lrelu":
        return jnp.where(acc >= 0, acc, 0.2 * acc)
    if activation == "prelu":
        # TODO(synk): PReLU slope treated as a fixed scalar (torch init 0.25),
        # not a learnable parameter, in this port.
        return jnp.where(acc >= 0, acc, prelu_slope * acc)
    if activation == "elu":
        return jnp.where(acc >= 0, acc, jnp.expm1(acc))
    if activation == "selu":
        alpha = 1.6732632423543772
        scale = 1.0507009873554805
        return scale * jnp.where(acc >= 0, acc, alpha * jnp.expm1(acc))
    if activation == "tanh":
        return jnp.tanh(acc)
    if activation == "sigmoid":
        return jax.nn.sigmoid(acc)
    if activation == "none":
        return acc
    raise ValueError(f"Unsupported activation: {activation}")


# ----------------------------- Pallas kernels ----------------------------------

def _make_fused_tap_kernel(tile_m, win, c_pad, tap_offsets, activation, prelu_slope):
    """Small-C path: pack the kh*kw shifted windows along the lane axis into a
    VMEM scratch and run ONE MXU GEMM with K = n_taps*c_pad."""

    def kernel(x_ref, w_ref, b_ref, o_ref, xcat_ref):
        base = pl.multiple_of(pl.program_id(1) * tile_m, tile_m)
        xw = x_ref[pl.ds(base, win), :]                    # [win, c_pad] bf16
        for t, off in enumerate(tap_offsets):
            # Row-tap offsets are multiples of 16 (Wp padded) -> aligned slices;
            # column-tap shifts are the only remaining sublane realignments.
            xcat_ref[:, t * c_pad:(t + 1) * c_pad] = xw[off:off + tile_m, :]
        acc = jnp.dot(xcat_ref[...], w_ref[...],           # bf16 x bf16 -> f32 (MXU)
                      preferred_element_type=jnp.float32)
        acc = acc + b_ref[...]                             # f32 bias broadcast
        acc = _apply_activation(acc, activation, prelu_slope)
        o_ref[...] = acc.astype(o_ref.dtype)               # bf16 writeback

    return kernel


def _make_per_tap_kernel(tile_m, tile_n, win, tap_offsets, activation, prelu_slope):
    """Large-C path (c_pad >= 128): per-tap GEMMs with a single running f32
    accumulator initialised from the bias (v7x MRB-friendly chain)."""
    # TODO(synk): replace the window load + static slices with direct per-tap
    # dynamic loads once unaligned dynamic sublane offsets on packed bf16 are
    # confirmed to lower cleanly; that removes the [win, c_pad] window copy.

    def kernel(x_ref, w_ref, b_ref, o_ref):
        base = pl.multiple_of(pl.program_id(1) * tile_m, tile_m)
        xw = x_ref[pl.ds(base, win), :]                    # [win, c_pad] bf16
        acc = jnp.broadcast_to(b_ref[...], (tile_m, tile_n)).astype(jnp.float32)
        for off in tap_offsets:
            t = tap_offsets.index(off)
            acc = acc + jnp.dot(xw[off:off + tile_m, :], w_ref[t],
                                preferred_element_type=jnp.float32)
        acc = _apply_activation(acc, activation, prelu_slope)
        o_ref[...] = acc.astype(o_ref.dtype)

    return kernel


def _conv_taps_pallas(x_flat, w_arr, bias2d, tap_offsets, *, tile_m, tile_n,
                      halo_pad, c_pad, fused, activation, prelu_slope):
    """x_flat [XR, c_pad] bf16 -> [M_pad, C_out_pad] bf16 (dense stride-1 rows)."""
    xr = x_flat.shape[0]
    c_out_pad = bias2d.shape[1]
    n_taps = len(tap_offsets)
    m_pad = xr - halo_pad
    assert m_pad % tile_m == 0 and c_out_pad % tile_n == 0
    grid_m = m_pad // tile_m
    grid_n = c_out_pad // tile_n
    win = tile_m + halo_pad

    # Single-buffer the resident operands (constant index maps); the weight and
    # bias only re-index along the outer C_out axis.
    x_mode = pl.Buffered(1)
    wb_mode = pl.Buffered(1) if grid_n == 1 else pl.Buffered(2)
    wb_bufs = 1 if grid_n == 1 else 2

    if fused:
        k_fused = n_taps * c_pad
        kernel = _make_fused_tap_kernel(tile_m, win, c_pad, tuple(tap_offsets),
                                        activation, prelu_slope)
        w_spec = pl.BlockSpec((k_fused, tile_n), lambda n, m: (0, n),
                              pipeline_mode=wb_mode)
        scratch_shapes = [pltpu.VMEM((tile_m, k_fused), jnp.bfloat16)]
        w_bytes = wb_bufs * _round_up(k_fused, 16) * _round_up(tile_n, 128) * 2
        scratch_bytes = tile_m * _round_up(k_fused, 128) * 2
    else:
        kernel = _make_per_tap_kernel(tile_m, tile_n, win, tuple(tap_offsets),
                                      activation, prelu_slope)
        w_spec = pl.BlockSpec((n_taps, c_pad, tile_n), lambda n, m: (0, 0, n),
                              pipeline_mode=wb_mode)
        scratch_shapes = []
        w_bytes = wb_bufs * n_taps * _round_up(c_pad, 16) * _round_up(tile_n, 128) * 2
        scratch_bytes = 0

    # VMEM footprint: x single-buffered resident, weight/bias per wb_bufs,
    # bf16 output double-buffered, plus the fused-K scratch.
    vmem_need = (xr * _round_up(c_pad, 128) * 2
                 + w_bytes
                 + wb_bufs * 8 * _round_up(tile_n, 128) * 4
                 + 2 * tile_m * _round_up(tile_n, 128) * 2
                 + scratch_bytes)

    try:
        vmem_cap = int(pltpu.get_tpu_info().vmem_capacity_bytes)
    except Exception:
        vmem_cap = 64 << 20          # conservative fallback (v7x per-core VMEM)
    resident_cap = (vmem_cap * 3) // 4   # ~96 MiB on v5e/v6e, ~48 MiB on v7x
    if vmem_need > resident_cap:
        # TODO(synk): streamed halo-DMA pipeline (manual P4 / pltpu.emit_pipeline)
        # for feature maps that do not fit resident in per-core VMEM (on v7x each
        # TensorCore holds its own copy of x under megacore partitioning).
        raise NotImplementedError(
            "feature map too large for the resident-VMEM conv path")
    # v5e's default scoped VMEM limit is 16 MiB -> pass an explicit limit early.
    vmem_limit = (int(min(vmem_need + (8 << 20), vmem_cap))
                  if vmem_need > (12 << 20) else None)

    flops = 2 * m_pad * n_taps * c_pad * c_out_pad
    transcendentals = (m_pad * c_out_pad
                       if activation in ("elu", "selu", "tanh", "sigmoid") else 0)
    bytes_accessed = (x_flat.size * 2 + w_arr.size * 2 + bias2d.size * 4
                      + m_pad * c_out_pad * 2)
    cost = pl.CostEstimate(flops=int(flops), transcendentals=int(transcendentals),
                           bytes_accessed=int(bytes_accessed))

    out = pl.pallas_call(
        kernel,
        out_shape=jax.ShapeDtypeStruct((m_pad, c_out_pad), jnp.bfloat16),
        grid_spec=pltpu.PrefetchScalarGridSpec(
            num_scalar_prefetch=0,
            grid=(grid_n, grid_m),
            in_specs=[
                pl.BlockSpec((xr, c_pad), lambda n, m: (0, 0), pipeline_mode=x_mode),
                w_spec,
                pl.BlockSpec((1, tile_n), lambda n, m: (0, n), pipeline_mode=wb_mode),
            ],
            out_specs=pl.BlockSpec((tile_m, tile_n), lambda n, m: (m, n)),
            scratch_shapes=scratch_shapes,
        ),
        compiler_params=pltpu.CompilerParams(
            dimension_semantics=("parallel", "parallel"),
            vmem_limit_bytes=vmem_limit),
        cost_estimate=cost,
    )(x_flat, w_arr, bias2d)
    return out


# ----------------------------- Conv2dLayer ------------------------------------

class Conv2dLayer:
    """JAX/Pallas port of the PyTorch Conv2dLayer (pad -> conv -> norm -> act)."""

    def __init__(self, in_channels, out_channels, kernel_size, stride=1,
                 padding=0, dilation=1, pad_type="replicate",
                 activation="none", norm="none", sn=False, tile_m=512, *, key):
        self.in_channels = in_channels
        self.out_channels = out_channels
        self.kernel_size = kernel_size
        self.stride = stride
        self.padding = padding
        self.dilation = dilation
        self.pad_type = pad_type
        self.activation = activation
        self.sn = sn
        self.tile_m = max(128, _round_up(tile_m, 128))
        self.prelu_slope = 0.25  # torch nn.PReLU default init

        if norm != "none":
            # TODO(synk): 'bn'/'in' normalization not implemented in this port.
            raise NotImplementedError("norm != 'none' not implemented")
        self.norm = None

        kw_, kb, ku, kv = jax.random.split(key, 4)
        fan_in = in_channels * kernel_size * kernel_size
        bound = 1.0 / np.sqrt(fan_in)
        # Deterministic synthetic init matching nn.Conv2d parameter shapes (OIHW).
        self.weight = jax.random.uniform(
            kw_, (out_channels, in_channels, kernel_size, kernel_size),
            minval=-bound, maxval=bound, dtype=jnp.float32)
        self.bias = jax.random.uniform(
            kb, (out_channels,), minval=-bound, maxval=bound, dtype=jnp.float32)
        if sn:
            self.u = _l2normalize(
                jax.random.normal(ku, (out_channels,), dtype=jnp.float32))
            self.v = _l2normalize(
                jax.random.normal(kv, (fan_in,), dtype=jnp.float32))

    def __call__(self, x):
        # x: NCHW float32 (PyTorch layout at the module boundary).
        N, C, H, W = x.shape
        kh = kw = self.kernel_size
        s, d = self.stride, self.dilation

        w = self.weight
        if self.sn:
            w = _spectral_normalize(w, self.u, self.v)

        # NHWC internal layout (channels on lanes); single boundary transposes only.
        x_nhwc = jnp.transpose(x, (0, 2, 3, 1))
        xp = _pad_nhwc(x_nhwc, self.padding, self.pad_type)
        _, Hp, Wp, _ = xp.shape
        H_out = (Hp - d * (kh - 1) - 1) // s + 1
        W_out = (Wp - d * (kw - 1) - 1) // s + 1

        # Pad the row length to a multiple of 16 (bf16 sublane pack) so the kh
        # row-tap offsets i*d*Wp16 are sublane-aligned (no realignment for them).
        Wp16 = _round_up(Wp, 16)
        if Wp16 != Wp:
            xp = jnp.pad(xp, ((0, 0), (0, 0), (0, Wp16 - Wp), (0, 0)))

        c_pad = _round_up(max(C, 8), 8)
        c_out_pad = _round_up(self.out_channels, 128)   # lane-dense output stores
        # 256-wide N tiles keep both MXU halves busy on v6e when it costs no
        # extra padding; otherwise stay at 128 (v5e MXU is 4x128x128 anyway).
        tile_n = 256 if c_out_pad % 256 == 0 else 128

        # Flatten (n, h, w) -> rows. With row-major flattening, tap (i, j) is a
        # constant flat offset i*d*Wp16 + j*d, so the conv is a sum of shifted
        # GEMMs (no im2col tensor, no patches transpose).
        tile_m = self.tile_m
        m_dense = N * Hp * Wp16
        m_pad = _round_up(m_dense, tile_m)
        halo = (kh - 1) * d * Wp16 + (kw - 1) * d
        halo_pad = _round_up(halo, 16)
        xr = m_pad + halo_pad

        x_flat = xp.reshape(m_dense, C)
        x_flat = jnp.pad(x_flat, ((0, xr - m_dense), (0, c_pad - C)))
        x_flat = x_flat.astype(jnp.bfloat16)            # bf16 MXU inputs, f32 accumulate

        w_taps = jnp.transpose(w, (2, 3, 1, 0)).reshape(kh * kw, C, self.out_channels)
        w_taps = jnp.pad(w_taps, ((0, 0), (0, c_pad - C),
                                  (0, c_out_pad - self.out_channels)))
        fused = c_pad < 128                              # fused-K GEMM for small C_in
        if fused:
            w_arr = w_taps.reshape(kh * kw * c_pad, c_out_pad).astype(jnp.bfloat16)
        else:
            w_arr = w_taps.astype(jnp.bfloat16)
        bias2d = jnp.pad(self.bias, (0, c_out_pad - self.out_channels))
        bias2d = bias2d.reshape(1, c_out_pad).astype(jnp.float32)

        tap_offsets = tuple(i * d * Wp16 + j * d for i in range(kh) for j in range(kw))

        out = _conv_taps_pallas(x_flat, w_arr, bias2d, tap_offsets,
                                tile_m=tile_m, tile_n=tile_n, halo_pad=halo_pad,
                                c_pad=c_pad, fused=fused,
                                activation=self.activation,
                                prelu_slope=self.prelu_slope)

        # Valid conv outputs live at the top-left (H_out, W_out) window of the
        # dense stride-1 result; stride is handled by subsampling.
        # TODO(synk): stride > 1 still computes the dense map (~s^2 extra rows);
        # fold stride into a space-to-depth rearrangement or the out index_map.
        # TODO(synk): for very small C_in a wrapper-side space-to-depth channel
        # packing would also make the contraction lanes dense (exact when the
        # packing factor equals the stride).
        out = out[:m_dense].reshape(N, Hp, Wp16, c_out_pad)
        out = out[:, 0:(H_out - 1) * s + 1:s, 0:(W_out - 1) * s + 1:s,
                  :self.out_channels]
        # Back to NCHW / f32 at the module boundary (kernel writes bf16).
        return jnp.transpose(out, (0, 3, 1, 2)).astype(jnp.float32)


# ----------------------------- demo / check -----------------------------------

if __name__ == "__main__":
    key = jax.random.PRNGKey(0)
    kx, kp = jax.random.split(key)

    N, C_in, H, W = 2, 4, 16, 16
    C_out, ksz, pad = 8, 3, 1

    x = jax.random.normal(kx, (N, C_in, H, W), dtype=jnp.float32)

    layer = Conv2dLayer(C_in, C_out, ksz, stride=1, padding=pad,
                        pad_type="replicate", activation="lrelu",
                        norm="none", sn=False, key=kp)

    y = jax.block_until_ready(jax.jit(layer.__call__)(x))
    assert y.shape == (N, C_out, H, W), y.shape

    # Reference: same bf16-input / f32-accumulate contraction via lax.conv (NHWC),
    # replicate pad + bias + leaky relu.
    xp_ref = _pad_nhwc(jnp.transpose(x, (0, 2, 3, 1)), pad, "replicate")
    xp_ref = xp_ref.astype(jnp.bfloat16)
    w_hwio = jnp.transpose(layer.weight, (2, 3, 1, 0)).astype(jnp.bfloat16)
    ref = jax.lax.conv_general_dilated(
        xp_ref, w_hwio, window_strides=(1, 1), padding="VALID",
        dimension_numbers=("NHWC", "HWIO", "NHWC"),
        preferred_element_type=jnp.float32)
    ref = ref + layer.bias.reshape(1, 1, 1, C_out)
    ref = jnp.where(ref >= 0, ref, 0.2 * ref)
    ref = jnp.transpose(ref, (0, 3, 1, 2))
    np.testing.assert_allclose(np.asarray(y), np.asarray(ref), atol=2e-2, rtol=2e-2)

    print("KERNEL_OK")
</pallas_src>

<mosaic_0001>
module attributes {stable_mosaic.version = 11 : i64} {
  func.func @kernel(%arg0: i32, %arg1: i32, %arg2: memref<1616x8xbf16, #tpu.memory_space<vmem>>, %arg3: memref<72x128xbf16, #tpu.memory_space<vmem>>, %arg4: memref<1x128xf32, #tpu.memory_space<vmem>>, %arg5: memref<512x128xbf16, #tpu.memory_space<vmem>>, %arg6: memref<512x72xbf16, #tpu.memory_space<vmem>>) attributes {dimension_semantics = [#tpu.dimension_semantics<parallel>, #tpu.dimension_semantics<parallel>], iteration_bounds = array<i64: 1, 3>, scalar_prefetch = 0 : i64, scratch_operands = 1 : i64, tpu.core_type = #tpu.core_type<tc>, window_params = [{pipeline_mode = #tpu.pipeline_mode<synchronous>, transform_indices = @transform_0, window_bounds = array<i64: 1616, 8>}, {pipeline_mode = #tpu.pipeline_mode<synchronous>, transform_indices = @transform_1, window_bounds = array<i64: 72, 128>}, {pipeline_mode = #tpu.pipeline_mode<synchronous>, transform_indices = @transform_2, window_bounds = array<i64: 1, 128>}, {transform_indices = @transform_3, window_bounds = array<i64: 512, 128>}]} {
    %c512_i32 = arith.constant 512 : i32
    %0 = arith.muli %arg1, %c512_i32 : i32
    %1 = tpu.assume_multiple %0, 512 : i32
    %2 = arith.index_cast %1 : i32 to index
    %c0 = arith.constant 0 : index
    %3 = vector.load %arg2[%2, %c0] : memref<1616x8xbf16, #tpu.memory_space<vmem>>, vector<592x8xbf16>
    %4 = vector.extract_strided_slice %3 {offsets = [0, 0], sizes = [512, 8], strides = [1, 1]} : vector<592x8xbf16> to vector<512x8xbf16>
    %c0_0 = arith.constant 0 : index
    %c0_1 = arith.constant 0 : index
    %5 = vector.load %arg6[%c0_0, %c0_1] : memref<512x72xbf16, #tpu.memory_space<vmem>>, vector<512x8xbf16>
    tpu.vector_store %arg6[%c0_0, %c0_1], %4 {strides = array<i32>} : memref<512x72xbf16, #tpu.memory_space<vmem>>, vector<512x8xbf16>,
    %6 = vector.extract_strided_slice %3 {offsets = [1, 0], sizes = [512, 8], strides = [1, 1]} : vector<592x8xbf16> to vector<512x8xbf16>
    %c0_2 = arith.constant 0 : index
    %c8 = arith.constant 8 : index
    %7 = vector.load %arg6[%c0_2, %c8] : memref<512x72xbf16, #tpu.memory_space<vmem>>, vector<512x8xbf16>
    tpu.vector_store %arg6[%c0_2, %c8], %6 {strides = array<i32>} : memref<512x72xbf16, #tpu.memory_space<vmem>>, vector<512x8xbf16>,
    %8 = vector.extract_strided_slice %3 {offsets = [2, 0], sizes = [512, 8], strides = [1, 1]} : vector<592x8xbf16> to vector<512x8xbf16>
    %c0_3 = arith.constant 0 : index
    %c16 = arith.constant 16 : index
    %9 = vector.load %arg6[%c0_3, %c16] : memref<512x72xbf16, #tpu.memory_space<vmem>>, vector<512x8xbf16>
    tpu.vector_store %arg6[%c0_3, %c16], %8 {strides = array<i32>} : memref<512x72xbf16, #tpu.memory_space<vmem>>, vector<512x8xbf16>,
    %10 = vector.extract_strided_slice %3 {offsets = [32, 0], sizes = [512, 8], strides = [1, 1]} : vector<592x8xbf16> to vector<512x8xbf16>
    %c0_4 = arith.constant 0 : index
    %c24 = arith.constant 24 : index
    %11 = vector.load %arg6[%c0_4, %c24] : memref<512x72xbf16, #tpu.memory_space<vmem>>, vector<512x8xbf16>
    tpu.vector_store %arg6[%c0_4, %c24], %10 {strides = array<i32>} : memref<512x72xbf16, #tpu.memory_space<vmem>>, vector<512x8xbf16>,
    %12 = vector.extract_strided_slice %3 {offsets = [33, 0], sizes = [512, 8], strides = [1, 1]} : vector<592x8xbf16> to vector<512x8xbf16>
    %c0_5 = arith.constant 0 : index
    %c32 = arith.constant 32 : index
    %13 = vector.load %arg6[%c0_5, %c32] : memref<512x72xbf16, #tpu.memory_space<vmem>>, vector<512x8xbf16>
    tpu.vector_store %arg6[%c0_5, %c32], %12 {strides = array<i32>} : memref<512x72xbf16, #tpu.memory_space<vmem>>, vector<512x8xbf16>,
    %14 = vector.extract_strided_slice %3 {offsets = [34, 0], sizes = [512, 8], strides = [1, 1]} : vector<592x8xbf16> to vector<512x8xbf16>
    %c0_6 = arith.constant 0 : index
    %c40 = arith.constant 40 : index
    %15 = vector.load %arg6[%c0_6, %c40] : memref<512x72xbf16, #tpu.memory_space<vmem>>, vector<512x8xbf16>
    tpu.vector_store %arg6[%c0_6, %c40], %14 {strides = array<i32>} : memref<512x72xbf16, #tpu.memory_space<vmem>>, vector<512x8xbf16>,
    %16 = vector.extract_strided_slice %3 {offsets = [64, 0], sizes = [512, 8], strides = [1, 1]} : vector<592x8xbf16> to vector<512x8xbf16>
    %c0_7 = arith.constant 0 : index
    %c48 = arith.constant 48 : index
    %17 = vector.load %arg6[%c0_7, %c48] : memref<512x72xbf16, #tpu.memory_space<vmem>>, vector<512x8xbf16>
    tpu.vector_store %arg6[%c0_7, %c48], %16 {strides = array<i32>} : memref<512x72xbf16, #tpu.memory_space<vmem>>, vector<512x8xbf16>,
    %18 = vector.extract_strided_slice %3 {offsets = [65, 0], sizes = [512, 8], strides = [1, 1]} : vector<592x8xbf16> to vector<512x8xbf16>
    %c0_8 = arith.constant 0 : index
    %c56 = arith.constant 56 : index
    %19 = vector.load %arg6[%c0_8, %c56] : memref<512x72xbf16, #tpu.memory_space<vmem>>, vector<512x8xbf16>
    tpu.vector_store %arg6[%c0_8, %c56], %18 {strides = array<i32>} : memref<512x72xbf16, #tpu.memory_space<vmem>>, vector<512x8xbf16>,
    %20 = vector.extract_strided_slice %3 {offsets = [66, 0], sizes = [512, 8], strides = [1, 1]} : vector<592x8xbf16> to vector<512x8xbf16>
    %c0_9 = arith.constant 0 : index
    %c64 = arith.constant 64 : index
    %21 = vector.load %arg6[%c0_9, %c64] : memref<512x72xbf16, #tpu.memory_space<vmem>>, vector<512x8xbf16>
    tpu.vector_store %arg6[%c0_9, %c64], %20 {strides = array<i32>} : memref<512x72xbf16, #tpu.memory_space<vmem>>, vector<512x8xbf16>,
    %c0_10 = arith.constant 0 : index
    %c0_11 = arith.constant 0 : index
    %22 = vector.load %arg6[%c0_10, %c0_11] : memref<512x72xbf16, #tpu.memory_space<vmem>>, vector<512x72xbf16>
    %c0_12 = arith.constant 0 : index
    %c0_13 = arith.constant 0 : index
    %23 = vector.load %arg3[%c0_12, %c0_13] : memref<72x128xbf16, #tpu.memory_space<vmem>>, vector<72x128xbf16>
    %cst = arith.constant dense<0.000000e+00> : vector<512x128xf32>
    %24 = tpu.matmul %22, %23, %cst {dimension_numbers = #tpu.dot_dimension_numbers<[1], [0], [0], [1], [0, 0, 1, 1], [], []>} : vector<512x72xbf16>, vector<72x128xbf16>, vector<512x128xf32> -> vector<512x128xf32>
    %c0_14 = arith.constant 0 : index
    %c0_15 = arith.constant 0 : index
    %25 = vector.load %arg4[%c0_14, %c0_15] : memref<1x128xf32, #tpu.memory_space<vmem>>, vector<1x128xf32>
    %26 = vector.broadcast %25 : vector<1x128xf32> to vector<512x128xf32>
    %27 = arith.addf %24, %26 : vector<512x128xf32>
    %cst_16 = arith.constant 0.000000e+00 : f32
    %28 = vector.broadcast %cst_16 : f32 to vector<512x128xf32>
    %29 = arith.cmpf oge, %27, %28 : vector<512x128xf32>
    %cst_17 = arith.constant 2.000000e-01 : f32
    %30 = vector.broadcast %cst_17 : f32 to vector<512x128xf32>
    %31 = arith.mulf %30, %27 : vector<512x128xf32>
    %32 = arith.select %29, %27, %31 : vector<512x128xi1>, vector<512x128xf32>
    %33 = arith.truncf %32 : vector<512x128xf32> to vector<512x128xbf16>
    %c0_18 = arith.constant 0 : index
    %c0_19 = arith.constant 0 : index
    %34 = vector.load %arg5[%c0_18, %c0_19] : memref<512x128xbf16, #tpu.memory_space<vmem>>, vector<512x128xbf16>
    tpu.vector_store %arg5[%c0_18, %c0_19], %33 {strides = array<i32>} : memref<512x128xbf16, #tpu.memory_space<vmem>>, vector<512x128xbf16>,
    return
  }
  func.func @transform_0(%arg0: i32, %arg1: i32) -> (i32, i32) {
    %c0_i32 = arith.constant 0 : i32
    %c0_i32_0 = arith.constant 0 : i32
    %c0_i32_1 = arith.constant 0 : i32
    return %c0_i32, %c0_i32_0 : i32, i32
  }
  func.func @transform_1(%arg0: i32, %arg1: i32) -> (i32, i32) {
    %c0_i32 = arith.constant 0 : i32
    %c0_i32_0 = arith.constant 0 : i32
    return %c0_i32, %arg0 : i32, i32
  }
  func.func @transform_2(%arg0: i32, %arg1: i32) -> (i32, i32) {
    %c0_i32 = arith.constant 0 : i32
    %c0_i32_0 = arith.constant 0 : i32
    return %c0_i32, %arg0 : i32, i32
  }
  func.func @transform_3(%arg0: i32, %arg1: i32) -> (i32, i32) {
    %c0_i32 = arith.constant 0 : i32
    return %arg1, %arg0 : i32, i32
  }
}

</mosaic_0001>

<llo_original>
// kernel: a_call__.1
$region0: #{a_call__.1}
  #allocation0 [shape = 'u32[]', space=smem, size = 0x4, offset = 0x4, fixed_abs, tag = 'smem constant byte address 0x4 - core index']
  #allocation1 [shape = 'u32[144,128]{1,0:T(1,128)}', space=vmem, size = 0x12000, scoped, tag = 'internal scratch']
  #allocation2 [shape = 'bf16[512,72]{1,0:T(16,128)(2,1)}', space=vmem, size = 0x20000, scoped, tag = 'scratch operand']
  %s0 = inlined_call_operand.vmem [shape: bf16[1616,8], index: 0, kind: input, shape index: {}]
  %s1 = inlined_call_operand.vmem [shape: bf16[72,128], index: 1, kind: input, shape index: {}]
  %s2 = inlined_call_operand.vmem [shape: f32[1,128], index: 2, kind: input, shape index: {}]
  %s3 = inlined_call_operand.vmem [shape: bf16[1536,128], index: 3, kind: output, shape index: {}]
  %s4 = sld [smem:[#allocation0]]
  $region45: #{a_call__.1} parent=0
    _
  %s6 = ssub.s32 1, %s4
  %s7 = scalar_select 0, %s6, %s4
  loop: start=0, step=1, limit=5
  $region2: #{a_call__.1} parent=0 // loop_pre_header
    _
  $region3: #{a_call__.1} parent=0 // loop_header
    %s9 = sphi 0, %s13
    %p10 = scmp.ge.s32.totalorder %s9, 5
    %s16 = sphi 0, %s28
    %s17 = sphi 0, %s24
    %s18 = sphi 0, %s16
    %s19 = sphi 0, %s17
    %s20 = sphi 0, %s18
    %s21 = sphi 0, %s19
    %s29 = sphi 0, %s29
    %s31 = sphi 0, %s29
    %s32 = sphi 0, %s31
    %s46 = sphi 0, %s32
    %s52 = sphi 0, %s54
    %s55 = sphi 0, %s52
    %s56 = sphi 0, %s55
    %s72 = sphi 0, %s56
    %s78 = sphi 0, %s80
    %s81 = sphi 0, %s78
    %s82 = sphi 0, %s81
    %s98 = sphi 0, %s82
    %s106 = sphi 0, %s108
    %s109 = sphi 0, %s106
    %s110 = sphi 0, %s109
    %s126 = sphi 0, %s110
  $region4: #{a_call__.1} parent=0 // loop_header_branch
    %12 = sbr.rel (%p10) target = $region8
  $region5: #{a_call__.1} parent=0 // loop_body
    %s14 = ssub.s32 %s9, 1
    %s15 = ssub.s32 %s9, 2
    %s22 = sadd.s32 1, %s17
    %p23 = scmp.ge.s32.totalorder %s22, 3
    %s24 = scalar_select %p23, 0, %s22
    %s25 = sadd.s32 1, %s16
    %s26 = scalar_select %p23, %s25, %s16
    %p27 = scmp.ge.s32.totalorder %s26, 1
    %s28 = scalar_select %p27, 0, %s26
    %s30 = sadd.s32 %s29, 1
    %p33 = scmp.eq.s32.totalorder %s9, 2
    %p34 = scmp.ne.s32.totalorder %s29, %s31
    %p35 = scmp.eq.s32.totalorder %s9, 0
    %p36 = por %p34, %p35
    %p37 = scmp.ne.s32.totalorder %s29, %s31
    %p38 = scmp.eq.s32.totalorder %s14, 2
    %p39 = por %p37, %p38
    %p40 = scmp.ne.s32.totalorder %s31, %s32
    %p41 = scmp.eq.s32.totalorder %s14, 0
    %p42 = por %p40, %p41
    %p43 = scmp.ne.s32.totalorder %s31, %s32
    %p44 = scmp.eq.s32.totalorder %s15, 2
    %p45 = por %p43, %p44
    %p47 = scmp.ne.s32.totalorder %s32, %s46
    %p48 = scmp.eq.s32.totalorder %s15, 0
    %p49 = por %p47, %p48
    %s50 = ssub.s32 %s16, %s28
    %p51 = scmp.eq.s32.totalorder %s50, 0
    %s53 = sadd.s32 %s52, 1
    %s54 = scalar_select %p51, %s52, %s53
    %p57 = pneg %p51
    %p58 = scmp.eq.s32.totalorder %s9, 2
    %p59 = por %p57, %p58
    %p60 = scmp.ne.s32.totalorder %s52, %s55
    %p61 = scmp.eq.s32.totalorder %s9, 0
    %p62 = por %p60, %p61
    %p63 = scmp.ne.s32.totalorder %s52, %s55
    %p64 = scmp.eq.s32.totalorder %s14, 2
    %p65 = por %p63, %p64
    %p66 = scmp.ne.s32.totalorder %s55, %s56
    %p67 = scmp.eq.s32.totalorder %s14, 0
    %p68 = por %p66, %p67
    %p69 = scmp.ne.s32.totalorder %s55, %s56
    %p70 = scmp.eq.s32.totalorder %s15, 2
    %p71 = por %p69, %p70
    %p73 = scmp.ne.s32.totalorder %s56, %s72
    %p74 = scmp.eq.s32.totalorder %s15, 0
    %p75 = por %p73, %p74
    %s76 = ssub.s32 %s16, %s28
    %p77 = scmp.eq.s32.totalorder %s76, 0
    %s79 = sadd.s32 %s78, 1
    %s80 = scalar_select %p77, %s78, %s79
    %p83 = pneg %p77
    %p84 = scmp.eq.s32.totalorder %s9, 2
    %p85 = por %p83, %p84
    %p86 = scmp.ne.s32.totalorder %s78, %s81
    %p87 = scmp.eq.s32.totalorder %s9, 0
    %p88 = por %p86, %p87
    %p89 = scmp.ne.s32.totalorder %s78, %s81
    %p90 = scmp.eq.s32.totalorder %s14, 2
    %p91 = por %p89, %p90
    %p92 = scmp.ne.s32.totalorder %s81, %s82
    %p93 = scmp.eq.s32.totalorder %s14, 0
    %p94 = por %p92, %p93
    %p95 = scmp.ne.s32.totalorder %s81, %s82
    %p96 = scmp.eq.s32.totalorder %s15, 2
    %p97 = por %p95, %p96
    %p99 = scmp.ne.s32.totalorder %s82, %s98
    %p100 = scmp.eq.s32.totalorder %s15, 0
    %p101 = por %p99, %p100
    %s102 = ssub.s32 %s17, %s24
    %s103 = ssub.s32 %s16, %s28
    %s104 = sor.u32 %s102, %s103
    %p105 = scmp.eq.s32.totalorder %s104, 0
    %s107 = sadd.s32 %s106, 1
    %s108 = scalar_select %p105, %s106, %s107
    %p111 = pneg %p105
    %p112 = scmp.eq.s32.totalorder %s9, 2
    %p113 = por %p111, %p112
    %p114 = scmp.ne.s32.totalorder %s106, %s109
    %p115 = scmp.eq.s32.totalorder %s9, 0
    %p116 = por %p114, %p115
    %p117 = scmp.ne.s32.totalorder %s106, %s109
    %p118 = scmp.eq.s32.totalorder %s14, 2
    %p119 = por %p117, %p118
    %p120 = scmp.ne.s32.totalorder %s109, %s110
    %p121 = scmp.eq.s32.totalorder %s14, 0
    %p122 = por %p120, %p121
    %p123 = scmp.ne.s32.totalorder %s109, %s110
    %p124 = scmp.eq.s32.totalorder %s15, 2
    %p125 = por %p123, %p124
    %p127 = scmp.ne.s32.totalorder %s110, %s126
    %p128 = scmp.eq.s32.totalorder %s15, 0
    %p129 = por %p127, %p128
    %p130 = scmp.le.s32.totalorder 1, %s9
    %p131 = scmp.lt.s32.totalorder %s9, 4
    %p132 = pnand %p130, %p131
    %p133 = pneg %p132
    // Predicated region
    $region9: #{a_call__.1} parent=5 // pred_check
      _
    $region10: #{a_call__.1} parent=5 // pred_check_branch
      %135 = sbr.rel (%p132) target = $region12
    $region11: #{a_call__.1} parent=5 // pred_region
      %s136 = ssub.s32 %s9, 1
      // Predicated region
      $region13: #{a_call__.1} parent=11 // pred_check
        %p137 = pneg %p42
      $region14: #{a_call__.1} parent=11 // pred_check_branch
        %139 = sbr.rel (%p137) target = $region16
      $region15: #{a_call__.1} parent=11 // pred_region
        _
      $region16: #{a_call__.1} parent=11 // pred_fallthru
        _
      // Predicated region
      $region17: #{a_call__.1} parent=11 // pred_check
        %p140 = pneg %p68
      $region18: #{a_call__.1} parent=11 // pred_check_branch
        %142 = sbr.rel (%p140) target = $region20
      $region19: #{a_call__.1} parent=11 // pred_region
        %p143 = scmp.lt.s32.totalorder %s18, 0
        %s144 = scalar_select %p143, %s18, 0
        %s145 = smul.addr %s144, 4
        %s146 = scalar_lea.vmem %s1, %s145
      $region20: #{a_call__.1} parent=11 // pred_fallthru
        _
      // Predicated region
      $region21: #{a_call__.1} parent=11 // pred_check
        %p147 = pneg %p94
      $region22: #{a_call__.1} parent=11 // pred_check_branch
        %149 = sbr.rel (%p147) target = $region24
      $region23: #{a_call__.1} parent=11 // pred_region
        %p150 = scmp.lt.s32.totalorder %s18, 0
        %s151 = scalar_select %p150, %s18, 0
        %s152 = scalar_lea.vmem %s2, %s151
      $region24: #{a_call__.1} parent=11 // pred_fallthru
        _
    $region12: #{a_call__.1} parent=5 // pred_fallthru
      _
    %p153 = scmp.lt.s32.totalorder %s9, 3
    // Predicated region
    $region25: #{a_call__.1} parent=5 // pred_check
      %p154 = pneg %p153
    $region26: #{a_call__.1} parent=5 // pred_check_branch
      %156 = sbr.rel (%p154) target = $region28
    $region27: #{a_call__.1} parent=5 // pred_region
      _
    $region28: #{a_call__.1} parent=5 // pred_fallthru
      _
    %p157 = scmp.le.s32.totalorder 1, %s9
    %p158 = scmp.lt.s32.totalorder %s9, 4
    %p159 = pnand %p157, %p158
    %p160 = pneg %p159
    // Predicated region
    $region29: #{a_call__.1} parent=5 // pred_check
      _
    $region30: #{a_call__.1} parent=5 // pred_check_branch
      %162 = sbr.rel (%p159) target = $region32
    $region31: #{a_call__.1} parent=5 // pred_region
      %s163 = ssub.s32 %s9, 1
      %p164 = pneg %p42
      %p165 = pneg %p39
      %p166 = scmp.lt.s32.totalorder %s18, 0
      %s167 = scalar_select %p166, %s18, 0
      %s168 = smul.addr %s167, 4
      %s169 = scalar_lea.vmem %s1, %s168
      %p170 = pneg %p68
      %p171 = pneg %p65
      %p172 = scmp.lt.s32.totalorder %s18, 0
      %s173 = scalar_select %p172, %s18, 0
      %s174 = scalar_lea.vmem %s2, %s173
      %p175 = pneg %p94
      %p176 = pneg %p91
      %p177 = pneg %p122
      %p178 = pneg %p119
      %s179 = smul.u32 64, %s19
      %p180 = scmp.lt.s32.totalorder %s179, 191
      %s181 = scalar_select %p180, %s179, 191
      %p182 = scmp.lt.s32.totalorder %s18, 0
      %s183 = scalar_select %p182, %s18, 0
      %s184 = sadd.s32 %s183, %s181
      %s185 = smul.addr %s184, 4
      %s186 = scalar_lea.vmem %s3, %s185
      %p187 = scmp.lt.s32.totalorder %s18, 0
      %s188 = scalar_select %p187, %s18, 0
      %s189 = smul.addr %s188, 4
      %s190 = scalar_lea.vmem %s1, %s189
      %p191 = scmp.lt.s32.totalorder %s18, 0
      %s192 = scalar_select %p191, %s18, 0
      %s193 = scalar_lea.vmem %s2, %s192
      %s194 = smul.u32 64, %s19
      %p195 = scmp.lt.s32.totalorder %s194, 191
      %s196 = scalar_select %p195, %s194, 191
      %p197 = scmp.lt.s32.totalorder %s18, 0
      %s198 = scalar_select %p197, %s18, 0
      %s199 = sadd.s32 %s198, %s196
      %s200 = smul.addr %s199, 4
      %s201 = scalar_lea.vmem %s3, %s200
      %s202 = smul.u32 64, %s19
      %s204 = smul.u32 %s19, 512
      %s205 = sshra.s32 %s204, 3
      %s206 = sand.u32 %s204, 7
      %s207 = smul.addr %s205, 4
      %s208 = scalar_lea.vmem %s0, %s207
      %v209 = vld [vmem:[%s208] sm:$0xf]
      %v210 = vld [vmem:[%s208 + $0x4] sm:$0xf]
      %v211 = vld [vmem:[%s208 + $0x8] sm:$0xf]
      %v212 = vld [vmem:[%s208 + $0xc] sm:$0xf]
      %v213 = vld [vmem:[%s208 + $0x10] sm:$0xf]
      %v214 = vld [vmem:[%s208 + $0x14] sm:$0xf]
      %v215 = vld [vmem:[%s208 + $0x18] sm:$0xf]
      %v216 = vld [vmem:[%s208 + $0x1c] sm:$0xf]
      %v217 = vld [vmem:[%s208 + $0x20] sm:$0xf]
      %v218 = vld [vmem:[%s208 + $0x24] sm:$0xf]
      %v219 = vld [vmem:[%s208 + $0x28] sm:$0xf]
      %v220 = vld [vmem:[%s208 + $0x2c] sm:$0xf]
      %v221 = vld [vmem:[%s208 + $0x30] sm:$0xf]
      %v222 = vld [vmem:[%s208 + $0x34] sm:$0xf]
      %v223 = vld [vmem:[%s208 + $0x38] sm:$0xf]
      %v224 = vld [vmem:[%s208 + $0x3c] sm:$0xf]
      %v225 = vld [vmem:[%s208 + $0x40] sm:$0xf]
      %v226 = vld [vmem:[%s208 + $0x44] sm:$0xf]
      %v227 = vld [vmem:[%s208 + $0x48] sm:$0xf]
      %v228 = vld [vmem:[%s208 + $0x4c] sm:$0xf]
      %v229 = vld [vmem:[%s208 + $0x50] sm:$0xf]
      %v230 = vld [vmem:[%s208 + $0x54] sm:$0xf]
      %v231 = vld [vmem:[%s208 + $0x58] sm:$0xf]
      %v232 = vld [vmem:[%s208 + $0x5c] sm:$0xf]
      %v233 = vld [vmem:[%s208 + $0x60] sm:$0xf]
      %v234 = vld [vmem:[%s208 + $0x64] sm:$0xf]
      %v235 = vld [vmem:[%s208 + $0x68] sm:$0xf]
      %v236 = vld [vmem:[%s208 + $0x6c] sm:$0xf]
      %v237 = vld [vmem:[%s208 + $0x70] sm:$0xf]
      %v238 = vld [vmem:[%s208 + $0x74] sm:$0xf]
      %v239 = vld [vmem:[%s208 + $0x78] sm:$0xf]
      %v240 = vld [vmem:[%s208 + $0x7c] sm:$0xf]
      %v241 = vld [vmem:[%s208 + $0x80] sm:$0xf]
      %v242 = vld [vmem:[%s208 + $0x84] sm:$0xf]
      %v243 = vld [vmem:[%s208 + $0x88] sm:$0xf]
      %v244 = vld [vmem:[%s208 + $0x8c] sm:$0xf]
      %v245 = vld [vmem:[%s208 + $0x90] sm:$0xf]
      %v246 = vld [vmem:[%s208 + $0x94] sm:$0xf]
      %v247 = vld [vmem:[%s208 + $0x98] sm:$0xf]
      %v248 = vld [vmem:[%s208 + $0x9c] sm:$0xf]
      %v249 = vld [vmem:[%s208 + $0xa0] sm:$0xf]
      %v250 = vld [vmem:[%s208 + $0xa4] sm:$0xf]
      %v251 = vld [vmem:[%s208 + $0xa8] sm:$0xf]
      %v252 = vld [vmem:[%s208 + $0xac] sm:$0xf]
      %v253 = vld [vmem:[%s208 + $0xb0] sm:$0xf]
      %v254 = vld [vmem:[%s208 + $0xb4] sm:$0xf]
      %v255 = vld [vmem:[%s208 + $0xb8] sm:$0xf]
      %v256 = vld [vmem:[%s208 + $0xbc] sm:$0xf]
      %v257 = vld [vmem:[%s208 + $0xc0] sm:$0xf]
      %v258 = vld [vmem:[%s208 + $0xc4] sm:$0xf]
      %v259 = vld [vmem:[%s208 + $0xc8] sm:$0xf]
      %v260 = vld [vmem:[%s208 + $0xcc] sm:$0xf]
      %v261 = vld [vmem:[%s208 + $0xd0] sm:$0xf]
      %v262 = vld [vmem:[%s208 + $0xd4] sm:$0xf]
      %v263 = vld [vmem:[%s208 + $0xd8] sm:$0xf]
      %v264 = vld [vmem:[%s208 + $0xdc] sm:$0xf]
      %v265 = vld [vmem:[%s208 + $0xe0] sm:$0xf]
      %v266 = vld [vmem:[%s208 + $0xe4] sm:$0xf]
      %v267 = vld [vmem:[%s208 + $0xe8] sm:$0xf]
      %v268 = vld [vmem:[%s208 + $0xec] sm:$0xf]
      %v269 = vld [vmem:[%s208 + $0xf0] sm:$0xf]
      %v270 = vld [vmem:[%s208 + $0xf4] sm:$0xf]
      %v271 = vld [vmem:[%s208 + $0xf8] sm:$0xf]
      %v272 = vld [vmem:[%s208 + $0xfc] sm:$0xf]
      %v273 = vld [vmem:[%s208 + $0x100] sm:$0xf]
      %v274 = vld [vmem:[%s208 + $0x104] sm:$0xf]
      %v275 = vld [vmem:[%s208 + $0x108] sm:$0xf]
      %v276 = vld [vmem:[%s208 + $0x10c] sm:$0xf]
      %v277 = vld [vmem:[%s208 + $0x110] sm:$0xf]
      %v278 = vld [vmem:[%s208 + $0x114] sm:$0xf]
      %v279 = vld [vmem:[%s208 + $0x118] sm:$0xf]
      %v280 = vld [vmem:[%s208 + $0x11c] sm:$0xf]
      %v281 = vld [vmem:[%s208 + $0x120] sm:$0xf]
      %v346 = vunpack.c.l.b16 %v209
      %v347 = vunpack.c.l.b16 %v210
      %v348 = vunpack.c.l.b16 %v211
      %v349 = vunpack.c.l.b16 %v212
      %v350 = vunpack.c.l.b16 %v213
      %v351 = vunpack.c.l.b16 %v214
      %v352 = vunpack.c.l.b16 %v215
      %v353 = vunpack.c.l.b16 %v216
      %v354 = vunpack.c.l.b16 %v217
      %v355 = vunpack.c.l.b16 %v218
      %v356 = vunpack.c.l.b16 %v219
      %v357 = vunpack.c.l.b16 %v220
      %v358 = vunpack.c.l.b16 %v221
      %v359 = vunpack.c.l.b16 %v222
      %v360 = vunpack.c.l.b16 %v223
      %v361 = vunpack.c.l.b16 %v224
      %v362 = vunpack.c.l.b16 %v225
      %v363 = vunpack.c.l.b16 %v226
      %v364 = vunpack.c.l.b16 %v227
      %v365 = vunpack.c.l.b16 %v228
      %v366 = vunpack.c.l.b16 %v229
      %v367 = vunpack.c.l.b16 %v230
      %v368 = vunpack.c.l.b16 %v231
      %v369 = vunpack.c.l.b16 %v232
      %v370 = vunpack.c.l.b16 %v233
      %v371 = vunpack.c.l.b16 %v234
      %v372 = vunpack.c.l.b16 %v235
      %v373 = vunpack.c.l.b16 %v236
      %v374 = vunpack.c.l.b16 %v237
      %v375 = vunpack.c.l.b16 %v238
      %v376 = vunpack.c.l.b16 %v239
      %v377 = vunpack.c.l.b16 %v240
      %v378 = vunpack.c.l.b16 %v241
      %v379 = vunpack.c.l.b16 %v242
      %v380 = vunpack.c.l.b16 %v243
      %v381 = vunpack.c.l.b16 %v244
      %v382 = vunpack.c.l.b16 %v245
      %v383 = vunpack.c.l.b16 %v246
      %v384 = vunpack.c.l.b16 %v247
      %v385 = vunpack.c.l.b16 %v248
      %v386 = vunpack.c.l.b16 %v249
      %v387 = vunpack.c.l.b16 %v250
      %v388 = vunpack.c.l.b16 %v251
      %v389 = vunpack.c.l.b16 %v252
      %v390 = vunpack.c.l.b16 %v253
      %v391 = vunpack.c.l.b16 %v254
      %v392 = vunpack.c.l.b16 %v255
      %v393 = vunpack.c.l.b16 %v256
      %v394 = vunpack.c.l.b16 %v257
      %v395 = vunpack.c.l.b16 %v258
      %v396 = vunpack.c.l.b16 %v259
      %v397 = vunpack.c.l.b16 %v260
      %v398 = vunpack.c.l.b16 %v261
      %v399 = vunpack.c.l.b16 %v262
      %v400 = vunpack.c.l.b16 %v263
      %v401 = vunpack.c.l.b16 %v264
      %v402 = vunpack.c.l.b16 %v265
      %v403 = vunpack.c.l.b16 %v266
      %v404 = vunpack.c.l.b16 %v267
      %v405 = vunpack.c.l.b16 %v268
      %v406 = vunpack.c.l.b16 %v269
      %v407 = vunpack.c.l.b16 %v270
      %v408 = vunpack.c.l.b16 %v271
      %v409 = vunpack.c.l.b16 %v272
      %v410 = vpack.c.b16 %v347, %v346
      %v411 = vpack.c.b16 %v349, %v348
      %v412 = vpack.c.b16 %v351, %v350
      %v413 = vpack.c.b16 %v353, %v352
      %v414 = vpack.c.b16 %v355, %v354
      %v415 = vpack.c.b16 %v357, %v356
      %v416 = vpack.c.b16 %v359, %v358
      %v417 = vpack.c.b16 %v361, %v360
      %v418 = vpack.c.b16 %v363, %v362
      %v419 = vpack.c.b16 %v365, %v364
      %v420 = vpack.c.b16 %v367, %v366
      %v421 = vpack.c.b16 %v369, %v368
      %v422 = vpack.c.b16 %v371, %v370
      %v423 = vpack.c.b16 %v373, %v372
      %v424 = vpack.c.b16 %v375, %v374
      %v425 = vpack.c.b16 %v377, %v376
      %v426 = vpack.c.b16 %v379, %v378
      %v427 = vpack.c.b16 %v381, %v380
      %v428 = vpack.c.b16 %v383, %v382
      %v429 = vpack.c.b16 %v385, %v384
      %v430 = vpack.c.b16 %v387, %v386
      %v431 = vpack.c.b16 %v389, %v388
      %v432 = vpack.c.b16 %v391, %v390
      %v433 = vpack.c.b16 %v393, %v392
      %v434 = vpack.c.b16 %v395, %v394
      %v435 = vpack.c.b16 %v397, %v396
      %v436 = vpack.c.b16 %v399, %v398
      %v437 = vpack.c.b16 %v401, %v400
      %v438 = vpack.c.b16 %v403, %v402
      %v439 = vpack.c.b16 %v405, %v404
      %v440 = vpack.c.b16 %v407, %v406
      %v441 = vpack.c.b16 %v409, %v408
      %vm474 = vcmask 64512
      %475 = vst.msk [vmem:[#allocation2] sm:$0xff] %vm474, %v410
      %476 = vst.msk [vmem:[#allocation2 + $0x8] sm:$0xff] %vm474, %v411
      %477 = vst.msk [vmem:[#allocation2 + $0x10] sm:$0xff] %vm474, %v412
      %478 = vst.msk [vmem:[#allocation2 + $0x18] sm:$0xff] %vm474, %v413
      %479 = vst.msk [vmem:[#allocation2 + $0x20] sm:$0xff] %vm474, %v414
      %480 = vst.msk [vmem:[#allocation2 + $0x28] sm:$0xff] %vm474, %v415
      %481 = vst.msk [vmem:[#allocation2 + $0x30] sm:$0xff] %vm474, %v416
      %482 = vst.msk [vmem:[#allocation2 + $0x38] sm:$0xff] %vm474, %v417
      %483 = vst.msk [vmem:[#allocation2 + $0x40] sm:$0xff] %vm474, %v418
      %484 = vst.msk [vmem:[#allocation2 + $0x48] sm:$0xff] %vm474, %v419
      %485 = vst.msk [vmem:[#allocation2 + $0x50] sm:$0xff] %vm474, %v420
      %486 = vst.msk [vmem:[#allocation2 + $0x58] sm:$0xff] %vm474, %v421
      %487 = vst.msk [vmem:[#allocation2 + $0x60] sm:$0xff] %vm474, %v422
      %488 = vst.msk [vmem:[#allocation2 + $0x68] sm:$0xff] %vm474, %v423
      %489 = vst.msk [vmem:[#allocation2 + $0x70] sm:$0xff] %vm474, %v424
      %490 = vst.msk [vmem:[#allocation2 + $0x78] sm:$0xff] %vm474, %v425
      %491 = vst.msk [vmem:[#allocation2 + $0x80] sm:$0xff] %vm474, %v426
      %492 = vst.msk [vmem:[#allocation2 + $0x88] sm:$0xff] %vm474, %v427
      %493 = vst.msk [vmem:[#allocation2 + $0x90] sm:$0xff] %vm474, %v428
      %494 = vst.msk [vmem:[#allocation2 + $0x98] sm:$0xff] %vm474, %v429
      %495 = vst.msk [vmem:[#allocation2 + $0xa0] sm:$0xff] %vm474, %v430
      %496 = vst.msk [vmem:[#allocation2 + $0xa8] sm:$0xff] %vm474, %v431
      %497 = vst.msk [vmem:[#allocation2 + $0xb0] sm:$0xff] %vm474, %v432
      %498 = vst.msk [vmem:[#allocation2 + $0xb8] sm:$0xff] %vm474, %v433
      %499 = vst.msk [vmem:[#allocation2 + $0xc0] sm:$0xff] %vm474, %v434
      %500 = vst.msk [vmem:[#allocation2 + $0xc8] sm:$0xff] %vm474, %v435
      %501 = vst.msk [vmem:[#allocation2 + $0xd0] sm:$0xff] %vm474, %v436
      %502 = vst.msk [vmem:[#allocation2 + $0xd8] sm:$0xff] %vm474, %v437
      %503 = vst.msk [vmem:[#allocation2 + $0xe0] sm:$0xff] %vm474, %v438
      %504 = vst.msk [vmem:[#allocation2 + $0xe8] sm:$0xff] %vm474, %v439
      %505 = vst.msk [vmem:[#allocation2 + $0xf0] sm:$0xff] %vm474, %v440
      %506 = vst.msk [vmem:[#allocation2 + $0xf8] sm:$0xff] %vm474, %v441
      %v508 = vunpack.c.l.b16 %v273
      %v509 = vpack.c.b16 %v508, %v508
      %vm510 = vsmask.f32 7424
      %v512 = vshrl.u32 %v410, 16
      %v514 = vshll.u32 %v410, 16
      %v516 = vrot.slane %v514, 1
      %v517 = vor.u32 %v512, %v516
      %v519 = vshll.u32 %v411, 16
      %v521 = vrot.slane %v519, 1
      %v522 = vsel %vm510, %v517, %v521
      %v523 = vshrl.u32 %v411, 16
      %v525 = vor.u32 %v523, %v521
      %v527 = vshll.u32 %v412, 16
      %v529 = vrot.slane %v527, 1
      %v530 = vsel %vm510, %v525, %v529
      %v531 = vshrl.u32 %v412, 16
      %v533 = vor.u32 %v531, %v529
      %v535 = vshll.u32 %v413, 16
      %v537 = vrot.slane %v535, 1
      %v538 = vsel %vm510, %v533, %v537
      %v539 = vshrl.u32 %v413, 16
      %v541 = vor.u32 %v539, %v537
      %v543 = vshll.u32 %v414, 16
      %v545 = vrot.slane %v543, 1
      %v546 = vsel %vm510, %v541, %v545
      %v547 = vshrl.u32 %v414, 16
      %v549 = vor.u32 %v547, %v545
      %v551 = vshll.u32 %v415, 16
      %v553 = vrot.slane %v551, 1
      %v554 = vsel %vm510, %v549, %v553
      %v555 = vshrl.u32 %v415, 16
      %v557 = vor.u32 %v555, %v553
      %v559 = vshll.u32 %v416, 16
      %v561 = vrot.slane %v559, 1
      %v562 = vsel %vm510, %v557, %v561
      %v563 = vshrl.u32 %v416, 16
      %v565 = vor.u32 %v563, %v561
      %v567 = vshll.u32 %v417, 16
      %v569 = vrot.slane %v567, 1
      %v570 = vsel %vm510, %v565, %v569
      %v571 = vshrl.u32 %v417, 16
      %v573 = vor.u32 %v571, %v569
      %v575 = vshll.u32 %v418, 16
      %v577 = vrot.slane %v575, 1
      %v578 = vsel %vm510, %v573, %v577
      %v579 = vshrl.u32 %v418, 16
      %v581 = vor.u32 %v579, %v577
      %v583 = vshll.u32 %v419, 16
      %v585 = vrot.slane %v583, 1
      %v586 = vsel %vm510, %v581, %v585
      %v587 = vshrl.u32 %v419, 16
      %v589 = vor.u32 %v587, %v585
      %v591 = vshll.u32 %v420, 16
      %v593 = vrot.slane %v591, 1
      %v594 = vsel %vm510, %v589, %v593
      %v595 = vshrl.u32 %v420, 16
      %v597 = vor.u32 %v595, %v593
      %v599 = vshll.u32 %v421, 16
      %v601 = vrot.slane %v599, 1
      %v602 = vsel %vm510, %v597, %v601
      %v603 = vshrl.u32 %v421, 16
      %v605 = vor.u32 %v603, %v601
      %v607 = vshll.u32 %v422, 16
      %v609 = vrot.slane %v607, 1
      %v610 = vsel %vm510, %v605, %v609
      %v611 = vshrl.u32 %v422, 16
      %v613 = vor.u32 %v611, %v609
      %v615 = vshll.u32 %v423, 16
      %v617 = vrot.slane %v615, 1
      %v618 = vsel %vm510, %v613, %v617
      %v619 = vshrl.u32 %v423, 16
      %v621 = vor.u32 %v619, %v617
      %v623 = vshll.u32 %v424, 16
      %v625 = vrot.slane %v623, 1
      %v626 = vsel %vm510, %v621, %v625
      %v627 = vshrl.u32 %v424, 16
      %v629 = vor.u32 %v627, %v625
      %v631 = vshll.u32 %v425, 16
      %v633 = vrot.slane %v631, 1
      %v634 = vsel %vm510, %v629, %v633
      %v635 = vshrl.u32 %v425, 16
      %v637 = vor.u32 %v635, %v633
      %v639 = vshll.u32 %v426, 16
      %v641 = vrot.slane %v639, 1
      %v642 = vsel %vm510, %v637, %v641
      %v643 = vshrl.u32 %v426, 16
      %v645 = vor.u32 %v643, %v641
      %v647 = vshll.u32 %v427, 16
      %v649 = vrot.slane %v647, 1
      %v650 = vsel %vm510, %v645, %v649
      %v651 = vshrl.u32 %v427, 16
      %v653 = vor.u32 %v651, %v649
      %v655 = vshll.u32 %v428, 16
      %v657 = vrot.slane %v655, 1
      %v658 = vsel %vm510, %v653, %v657
      %v659 = vshrl.u32 %v428, 16
      %v661 = vor.u32 %v659, %v657
      %v663 = vshll.u32 %v429, 16
      %v665 = vrot.slane %v663, 1
      %v666 = vsel %vm510, %v661, %v665
      %v667 = vshrl.u32 %v429, 16
      %v669 = vor.u32 %v667, %v665
      %v671 = vshll.u32 %v430, 16
      %v673 = vrot.slane %v671, 1
      %v674 = vsel %vm510, %v669, %v673
      %v675 = vshrl.u32 %v430, 16
      %v677 = vor.u32 %v675, %v673
      %v679 = vshll.u32 %v431, 16
      %v681 = vrot.slane %v679, 1
      %v682 = vsel %vm510, %v677, %v681
      %v683 = vshrl.u32 %v431, 16
      %v685 = vor.u32 %v683, %v681
      %v687 = vshll.u32 %v432, 16
      %v689 = vrot.slane %v687, 1
      %v690 = vsel %vm510, %v685, %v689
      %v691 = vshrl.u32 %v432, 16
      %v693 = vor.u32 %v691, %v689
      %v695 = vshll.u32 %v433, 16
      %v697 = vrot.slane %v695, 1
      %v698 = vsel %vm510, %v693, %v697
      %v699 = vshrl.u32 %v433, 16
      %v701 = vor.u32 %v699, %v697
      %v703 = vshll.u32 %v434, 16
      %v705 = vrot.slane %v703, 1
      %v706 = vsel %vm510, %v701, %v705
      %v707 = vshrl.u32 %v434, 16
      %v709 = vor.u32 %v707, %v705
      %v711 = vshll.u32 %v435, 16
      %v713 = vrot.slane %v711, 1
      %v714 = vsel %vm510, %v709, %v713
      %v715 = vshrl.u32 %v435, 16
      %v717 = vor.u32 %v715, %v713
      %v719 = vshll.u32 %v436, 16
      %v721 = vrot.slane %v719, 1
      %v722 = vsel %vm510, %v717, %v721
      %v723 = vshrl.u32 %v436, 16
      %v725 = vor.u32 %v723, %v721
      %v727 = vshll.u32 %v437, 16
      %v729 = vrot.slane %v727, 1
      %v730 = vsel %vm510, %v725, %v729
      %v731 = vshrl.u32 %v437, 16
      %v733 = vor.u32 %v731, %v729
      %v735 = vshll.u32 %v438, 16
      %v737 = vrot.slane %v735, 1
      %v738 = vsel %vm510, %v733, %v737
      %v739 = vshrl.u32 %v438, 16
      %v741 = vor.u32 %v739, %v737
      %v743 = vshll.u32 %v439, 16
      %v745 = vrot.slane %v743, 1
      %v746 = vsel %vm510, %v741, %v745
      %v747 = vshrl.u32 %v439, 16
      %v749 = vor.u32 %v747, %v745
      %v751 = vshll.u32 %v440, 16
      %v753 = vrot.slane %v751, 1
      %v754 = vsel %vm510, %v749, %v753
      %v755 = vshrl.u32 %v440, 16
      %v757 = vor.u32 %v755, %v753
      %v759 = vshll.u32 %v441, 16
      %v761 = vrot.slane %v759, 1
      %v762 = vsel %vm510, %v757, %v761
      %v763 = vshrl.u32 %v441, 16
      %v765 = vor.u32 %v763, %v761
      %v767 = vshll.u32 %v509, 16
      %v769 = vrot.slane %v767, 1
      %v770 = vsel %vm510, %v765, %v769
      %771 = vrot.lane.b32.xlu0 %v522, 8
      %v772 = vpop.permute.xlu0 %771
      %773 = vrot.lane.b32.xlu0 %v530, 8
      %v774 = vpop.permute.xlu0 %773
      %775 = vrot.lane.b32.xlu0 %v538, 8
      %v776 = vpop.permute.xlu0 %775
      %777 = vrot.lane.b32.xlu0 %v546, 8
      %v778 = vpop.permute.xlu0 %777
      %779 = vrot.lane.b32.xlu0 %v554, 8
      %v780 = vpop.permute.xlu0 %779
      %781 = vrot.lane.b32.xlu0 %v562, 8
      %v782 = vpop.permute.xlu0 %781
      %783 = vrot.lane.b32.xlu0 %v570, 8
      %v784 = vpop.permute.xlu0 %783
      %785 = vrot.lane.b32.xlu0 %v578, 8
      %v786 = vpop.permute.xlu0 %785
      %787 = vrot.lane.b32.xlu0 %v586, 8
      %v788 = vpop.permute.xlu0 %787
      %789 = vrot.lane.b32.xlu0 %v594, 8
      %v790 = vpop.permute.xlu0 %789
      %791 = vrot.lane.b32.xlu0 %v602, 8
      %v792 = vpop.permute.xlu0 %791
      %793 = vrot.lane.b32.xlu0 %v610, 8
      %v794 = vpop.permute.xlu0 %793
      %795 = vrot.lane.b32.xlu0 %v618, 8
      %v796 = vpop.permute.xlu0 %795
      %797 = vrot.lane.b32.xlu0 %v626, 8
      %v798 = vpop.permute.xlu0 %797
      %799 = vrot.lane.b32.xlu0 %v634, 8
      %v800 = vpop.permute.xlu0 %799
      %801 = vrot.lane.b32.xlu0 %v642, 8
      %v802 = vpop.permute.xlu0 %801
      %803 = vrot.lane.b32.xlu0 %v650, 8
      %v804 = vpop.permute.xlu0 %803
      %805 = vrot.lane.b32.xlu0 %v658, 8
      %v806 = vpop.permute.xlu0 %805
      %807 = vrot.lane.b32.xlu0 %v666, 8
      %v808 = vpop.permute.xlu0 %807
      %809 = vrot.lane.b32.xlu0 %v674, 8
      %v810 = vpop.permute.xlu0 %809
      %811 = vrot.lane.b32.xlu0 %v682, 8
      %v812 = vpop.permute.xlu0 %811
      %813 = vrot.lane.b32.xlu0 %v690, 8
      %v814 = vpop.permute.xlu0 %813
      %815 = vrot.lane.b32.xlu0 %v698, 8
      %v816 = vpop.permute.xlu0 %815
      %817 = vrot.lane.b32.xlu0 %v706, 8
      %v818 = vpop.permute.xlu0 %817
      %819 = vrot.lane.b32.xlu0 %v714, 8
      %v820 = vpop.permute.xlu0 %819
      %821 = vrot.lane.b32.xlu0 %v722, 8
      %v822 = vpop.permute.xlu0 %821
      %823 = vrot.lane.b32.xlu0 %v730, 8
      %v824 = vpop.permute.xlu0 %823
      %825 = vrot.lane.b32.xlu0 %v738, 8
      %v826 = vpop.permute.xlu0 %825
      %827 = vrot.lane.b32.xlu0 %v746, 8
      %v828 = vpop.permute.xlu0 %827
      %829 = vrot.lane.b32.xlu0 %v754, 8
      %v830 = vpop.permute.xlu0 %829
      %831 = vrot.lane.b32.xlu0 %v762, 8
      %v832 = vpop.permute.xlu0 %831
      %833 = vrot.lane.b32.xlu0 %v770, 8
      %v834 = vpop.permute.xlu0 %833
      %vm867 = vcmask 130112
      %868 = vst.msk [vmem:[#allocation2] sm:$0xff] %vm867, %v772
      %869 = vst.msk [vmem:[#allocation2 + $0x8] sm:$0xff] %vm867, %v774
      %870 = vst.msk [vmem:[#allocation2 + $0x10] sm:$0xff] %vm867, %v776
      %871 = vst.msk [vmem:[#allocation2 + $0x18] sm:$0xff] %vm867, %v778
      %872 = vst.msk [vmem:[#allocation2 + $0x20] sm:$0xff] %vm867, %v780
      %873 = vst.msk [vmem:[#allocation2 + $0x28] sm:$0xff] %vm867, %v782
      %874 = vst.msk [vmem:[#allocation2 + $0x30] sm:$0xff] %vm867, %v784
      %875 = vst.msk [vmem:[#allocation2 + $0x38] sm:$0xff] %vm867, %v786
      %876 = vst.msk [vmem:[#allocation2 + $0x40] sm:$0xff] %vm867, %v788
      %877 = vst.msk [vmem:[#allocation2 + $0x48] sm:$0xff] %vm867, %v790
      %878 = vst.msk [vmem:[#allocation2 + $0x50] sm:$0xff] %vm867, %v792
      %879 = vst.msk [vmem:[#allocation2 + $0x58] sm:$0xff] %vm867, %v794
      %880 = vst.msk [vmem:[#allocation2 + $0x60] sm:$0xff] %vm867, %v796
      %881 = vst.msk [vmem:[#allocation2 + $0x68] sm:$0xff] %vm867, %v798
      %882 = vst.msk [vmem:[#allocation2 + $0x70] sm:$0xff] %vm867, %v800
      %883 = vst.msk [vmem:[#allocation2 + $0x78] sm:$0xff] %vm867, %v802
      %884 = vst.msk [vmem:[#allocation2 + $0x80] sm:$0xff] %vm867, %v804
      %885 = vst.msk [vmem:[#allocation2 + $0x88] sm:$0xff] %vm867, %v806
      %886 = vst.msk [vmem:[#allocation2 + $0x90] sm:$0xff] %vm867, %v808
      %887 = vst.msk [vmem:[#allocation2 + $0x98] sm:$0xff] %vm867, %v810
      %888 = vst.msk [vmem:[#allocation2 + $0xa0] sm:$0xff] %vm867, %v812
      %889 = vst.msk [vmem:[#allocation2 + $0xa8] sm:$0xff] %vm867, %v814
      %890 = vst.msk [vmem:[#allocation2 + $0xb0] sm:$0xff] %vm867, %v816
      %891 = vst.msk [vmem:[#allocation2 + $0xb8] sm:$0xff] %vm867, %v818
      %892 = vst.msk [vmem:[#allocation2 + $0xc0] sm:$0xff] %vm867, %v820
      %893 = vst.msk [vmem:[#allocation2 + $0xc8] sm:$0xff] %vm867, %v822
      %894 = vst.msk [vmem:[#allocation2 + $0xd0] sm:$0xff] %vm867, %v824
      %895 = vst.msk [vmem:[#allocation2 + $0xd8] sm:$0xff] %vm867, %v826
      %896 = vst.msk [vmem:[#allocation2 + $0xe0] sm:$0xff] %vm867, %v828
      %897 = vst.msk [vmem:[#allocation2 + $0xe8] sm:$0xff] %vm867, %v830
      %898 = vst.msk [vmem:[#allocation2 + $0xf0] sm:$0xff] %vm867, %v832
      %899 = vst.msk [vmem:[#allocation2 + $0xf8] sm:$0xff] %vm867, %v834
      %vm900 = vcmask 1046528
      %v901 = vrot.slane %v410, 1
      %v902 = vrot.slane %v411, 1
      %v903 = vsel %vm900, %v901, %v902
      %v904 = vrot.slane %v412, 1
      %v905 = vsel %vm900, %v902, %v904
      %v906 = vrot.slane %v413, 1
      %v907 = vsel %vm900, %v904, %v906
      %v908 = vrot.slane %v414, 1
      %v909 = vsel %vm900, %v906, %v908
      %v910 = vrot.slane %v415, 1
      %v911 = vsel %vm900, %v908, %v910
      %v912 = vrot.slane %v416, 1
      %v913 = vsel %vm900, %v910, %v912
      %v914 = vrot.slane %v417, 1
      %v915 = vsel %vm900, %v912, %v914
      %v916 = vrot.slane %v418, 1
      %v917 = vsel %vm900, %v914, %v916
      %v918 = vrot.slane %v419, 1
      %v919 = vsel %vm900, %v916, %v918
      %v920 = vrot.slane %v420, 1
      %v921 = vsel %vm900, %v918, %v920
      %v922 = vrot.slane %v421, 1
      %v923 = vsel %vm900, %v920, %v922
      %v924 = vrot.slane %v422, 1
      %v925 = vsel %vm900, %v922, %v924
      %v926 = vrot.slane %v423, 1
      %v927 = vsel %vm900, %v924, %v926
      %v928 = vrot.slane %v424, 1
      %v929 = vsel %vm900, %v926, %v928
      %v930 = vrot.slane %v425, 1
      %v931 = vsel %vm900, %v928, %v930
      %v932 = vrot.slane %v426, 1
      %v933 = vsel %vm900, %v930, %v932
      %v934 = vrot.slane %v427, 1
      %v935 = vsel %vm900, %v932, %v934
      %v936 = vrot.slane %v428, 1
      %v937 = vsel %vm900, %v934, %v936
      %v938 = vrot.slane %v429, 1
      %v939 = vsel %vm900, %v936, %v938
      %v940 = vrot.slane %v430, 1
      %v941 = vsel %vm900, %v938, %v940
      %v942 = vrot.slane %v431, 1
      %v943 = vsel %vm900, %v940, %v942
      %v944 = vrot.slane %v432, 1
      %v945 = vsel %vm900, %v942, %v944
      %v946 = vrot.slane %v433, 1
      %v947 = vsel %vm900, %v944, %v946
      %v948 = vrot.slane %v434, 1
      %v949 = vsel %vm900, %v946, %v948
      %v950 = vrot.slane %v435, 1
      %v951 = vsel %vm900, %v948, %v950
      %v952 = vrot.slane %v436, 1
      %v953 = vsel %vm900, %v950, %v952
      %v954 = vrot.slane %v437, 1
      %v955 = vsel %vm900, %v952, %v954
      %v956 = vrot.slane %v438, 1
      %v957 = vsel %vm900, %v954, %v956
      %v958 = vrot.slane %v439, 1
      %v959 = vsel %vm900, %v956, %v958
      %v960 = vrot.slane %v440, 1
      %v961 = vsel %vm900, %v958, %v960
      %v962 = vrot.slane %v441, 1
      %v963 = vsel %vm900, %v960, %v962
      %v964 = vrot.slane %v509, 1
      %v965 = vsel %vm900, %v962, %v964
      %966 = vrot.lane.b32.xlu0 %v903, 16
      %v967 = vpop.permute.xlu0 %966
      %968 = vrot.lane.b32.xlu0 %v905, 16
      %v969 = vpop.permute.xlu0 %968
      %970 = vrot.lane.b32.xlu0 %v907, 16
      %v971 = vpop.permute.xlu0 %970
      %972 = vrot.lane.b32.xlu0 %v909, 16
      %v973 = vpop.permute.xlu0 %972
      %974 = vrot.lane.b32.xlu0 %v911, 16
      %v975 = vpop.permute.xlu0 %974
      %976 = vrot.lane.b32.xlu0 %v913, 16
      %v977 = vpop.permute.xlu0 %976
      %978 = vrot.lane.b32.xlu0 %v915, 16
      %v979 = vpop.permute.xlu0 %978
      %980 = vrot.lane.b32.xlu0 %v917, 16
      %v981 = vpop.permute.xlu0 %980
      %982 = vrot.lane.b32.xlu0 %v919, 16
      %v983 = vpop.permute.xlu0 %982
      %984 = vrot.lane.b32.xlu0 %v921, 16
      %v985 = vpop.permute.xlu0 %984
      %986 = vrot.lane.b32.xlu0 %v923, 16
      %v987 = vpop.permute.xlu0 %986
      %988 = vrot.lane.b32.xlu0 %v925, 16
      %v989 = vpop.permute.xlu0 %988
      %990 = vrot.lane.b32.xlu0 %v927, 16
      %v991 = vpop.permute.xlu0 %990
      %992 = vrot.lane.b32.xlu0 %v929, 16
      %v993 = vpop.permute.xlu0 %992
      %994 = vrot.lane.b32.xlu0 %v931, 16
      %v995 = vpop.permute.xlu0 %994
      %996 = vrot.lane.b32.xlu0 %v933, 16
      %v997 = vpop.permute.xlu0 %996
      %998 = vrot.lane.b32.xlu0 %v935, 16
      %v999 = vpop.permute.xlu0 %998
      %1000 = vrot.lane.b32.xlu0 %v937, 16
      %v1001 = vpop.permute.xlu0 %1000
      %1002 = vrot.lane.b32.xlu0 %v939, 16
      %v1003 = vpop.permute.xlu0 %1002
      %1004 = vrot.lane.b32.xlu0 %v941, 16
      %v1005 = vpop.permute.xlu0 %1004
      %1006 = vrot.lane.b32.xlu0 %v943, 16
      %v1007 = vpop.permute.xlu0 %1006
      %1008 = vrot.lane.b32.xlu0 %v945, 16
      %v1009 = vpop.permute.xlu0 %1008
      %1010 = vrot.lane.b32.xlu0 %v947, 16
      %v1011 = vpop.permute.xlu0 %1010
      %1012 = vrot.lane.b32.xlu0 %v949, 16
      %v1013 = vpop.permute.xlu0 %1012
      %1014 = vrot.lane.b32.xlu0 %v951, 16
      %v1015 = vpop.permute.xlu0 %1014
      %1016 = vrot.lane.b32.xlu0 %v953, 16
      %v1017 = vpop.permute.xlu0 %1016
      %1018 = vrot.lane.b32.xlu0 %v955, 16
      %v1019 = vpop.permute.xlu0 %1018
      %1020 = vrot.lane.b32.xlu0 %v957, 16
      %v1021 = vpop.permute.xlu0 %1020
      %1022 = vrot.lane.b32.xlu0 %v959, 16
      %v1023 = vpop.permute.xlu0 %1022
      %1024 = vrot.lane.b32.xlu0 %v961, 16
      %v1025 = vpop.permute.xlu0 %1024
      %1026 = vrot.lane.b32.xlu0 %v963, 16
      %v1027 = vpop.permute.xlu0 %1026
      %1028 = vrot.lane.b32.xlu0 %v965, 16
      %v1029 = vpop.permute.xlu0 %1028
      %vm1062 = vcmask 195712
      %1063 = vst.msk [vmem:[#allocation2] sm:$0xff] %vm1062, %v967
      %1064 = vst.msk [vmem:[#allocation2 + $0x8] sm:$0xff] %vm1062, %v969
      %1065 = vst.msk [vmem:[#allocation2 + $0x10] sm:$0xff] %vm1062, %v971
      %1066 = vst.msk [vmem:[#allocation2 + $0x18] sm:$0xff] %vm1062, %v973
      %1067 = vst.msk [vmem:[#allocation2 + $0x20] sm:$0xff] %vm1062, %v975
      %1068 = vst.msk [vmem:[#allocation2 + $0x28] sm:$0xff] %vm1062, %v977
      %1069 = vst.msk [vmem:[#allocation2 + $0x30] sm:$0xff] %vm1062, %v979
      %1070 = vst.msk [vmem:[#allocation2 + $0x38] sm:$0xff] %vm1062, %v981
      %1071 = vst.msk [vmem:[#allocation2 + $0x40] sm:$0xff] %vm1062, %v983
      %1072 = vst.msk [vmem:[#allocation2 + $0x48] sm:$0xff] %vm1062, %v985
      %1073 = vst.msk [vmem:[#allocation2 + $0x50] sm:$0xff] %vm1062, %v987
      %1074 = vst.msk [vmem:[#allocation2 + $0x58] sm:$0xff] %vm1062, %v989
      %1075 = vst.msk [vmem:[#allocation2 + $0x60] sm:$0xff] %vm1062, %v991
      %1076 = vst.msk [vmem:[#allocation2 + $0x68] sm:$0xff] %vm1062, %v993
      %1077 = vst.msk [vmem:[#allocation2 + $0x70] sm:$0xff] %vm1062, %v995
      %1078 = vst.msk [vmem:[#allocation2 + $0x78] sm:$0xff] %vm1062, %v997
      %1079 = vst.msk [vmem:[#allocation2 + $0x80] sm:$0xff] %vm1062, %v999
      %1080 = vst.msk [vmem:[#allocation2 + $0x88] sm:$0xff] %vm1062, %v1001
      %1081 = vst.msk [vmem:[#allocation2 + $0x90] sm:$0xff] %vm1062, %v1003
      %1082 = vst.msk [vmem:[#allocation2 + $0x98] sm:$0xff] %vm1062, %v1005
      %1083 = vst.msk [vmem:[#allocation2 + $0xa0] sm:$0xff] %vm1062, %v1007
      %1084 = vst.msk [vmem:[#allocation2 + $0xa8] sm:$0xff] %vm1062, %v1009
      %1085 = vst.msk [vmem:[#allocation2 + $0xb0] sm:$0xff] %vm1062, %v1011
      %1086 = vst.msk [vmem:[#allocation2 + $0xb8] sm:$0xff] %vm1062, %v1013
      %1087 = vst.msk [vmem:[#allocation2 + $0xc0] sm:$0xff] %vm1062, %v1015
      %1088 = vst.msk [vmem:[#allocation2 + $0xc8] sm:$0xff] %vm1062, %v1017
      %1089 = vst.msk [vmem:[#allocation2 + $0xd0] sm:$0xff] %vm1062, %v1019
      %1090 = vst.msk [vmem:[#allocation2 + $0xd8] sm:$0xff] %vm1062, %v1021
      %1091 = vst.msk [vmem:[#allocation2 + $0xe0] sm:$0xff] %vm1062, %v1023
      %1092 = vst.msk [vmem:[#allocation2 + $0xe8] sm:$0xff] %vm1062, %v1025
      %1093 = vst.msk [vmem:[#allocation2 + $0xf0] sm:$0xff] %vm1062, %v1027
      %1094 = vst.msk [vmem:[#allocation2 + $0xf8] sm:$0xff] %vm1062, %v1029
      %v1098 = vunpack.c.l.b16 %v274
      %v1099 = vunpack.c.l.b16 %v275
      %v1100 = vunpack.c.l.b16 %v276
      %v1101 = vpack.c.b16 %v1098, %v508
      %v1102 = vpack.c.b16 %v1100, %v1099
      %1103 = vrot.lane.b32.xlu0 %v412, 24
      %v1104 = vpop.permute.xlu0 %1103
      %1105 = vrot.lane.b32.xlu0 %v413, 24
      %v1106 = vpop.permute.xlu0 %1105
      %1107 = vrot.lane.b32.xlu0 %v414, 24
      %v1108 = vpop.permute.xlu0 %1107
      %1109 = vrot.lane.b32.xlu0 %v415, 24
      %v1110 = vpop.permute.xlu0 %1109
      %1111 = vrot.lane.b32.xlu0 %v416, 24
      %v1112 = vpop.permute.xlu0 %1111
      %1113 = vrot.lane.b32.xlu0 %v417, 24
      %v1114 = vpop.permute.xlu0 %1113
      %1115 = vrot.lane.b32.xlu0 %v418, 24
      %v1116 = vpop.permute.xlu0 %1115
      %1117 = vrot.lane.b32.xlu0 %v419, 24
      %v1118 = vpop.permute.xlu0 %1117
      %1119 = vrot.lane.b32.xlu0 %v420, 24
      %v1120 = vpop.permute.xlu0 %1119
      %1121 = vrot.lane.b32.xlu0 %v421, 24
      %v1122 = vpop.permute.xlu0 %1121
      %1123 = vrot.lane.b32.xlu0 %v422, 24
      %v1124 = vpop.permute.xlu0 %1123
      %1125 = vrot.lane.b32.xlu0 %v423, 24
      %v1126 = vpop.permute.xlu0 %1125
      %1127 = vrot.lane.b32.xlu0 %v424, 24
      %v1128 = vpop.permute.xlu0 %1127
      %1129 = vrot.lane.b32.xlu0 %v425, 24
      %v1130 = vpop.permute.xlu0 %1129
      %1131 = vrot.lane.b32.xlu0 %v426, 24
      %v1132 = vpop.permute.xlu0 %1131
      %1133 = vrot.lane.b32.xlu0 %v427, 24
      %v1134 = vpop.permute.xlu0 %1133
      %1135 = vrot.lane.b32.xlu0 %v428, 24
      %v1136 = vpop.permute.xlu0 %1135
      %1137 = vrot.lane.b32.xlu0 %v429, 24
      %v1138 = vpop.permute.xlu0 %1137
      %1139 = vrot.lane.b32.xlu0 %v430, 24
      %v1140 = vpop.permute.xlu0 %1139
      %1141 = vrot.lane.b32.xlu0 %v431, 24
      %v1142 = vpop.permute.xlu0 %1141
      %1143 = vrot.lane.b32.xlu0 %v432, 24
      %v1144 = vpop.permute.xlu0 %1143
      %1145 = vrot.lane.b32.xlu0 %v433, 24
      %v1146 = vpop.permute.xlu0 %1145
      %1147 = vrot.lane.b32.xlu0 %v434, 24
      %v1148 = vpop.permute.xlu0 %1147
      %1149 = vrot.lane.b32.xlu0 %v435, 24
      %v1150 = vpop.permute.xlu0 %1149
      %1151 = vrot.lane.b32.xlu0 %v436, 24
      %v1152 = vpop.permute.xlu0 %1151
      %1153 = vrot.lane.b32.xlu0 %v437, 24
      %v1154 = vpop.permute.xlu0 %1153
      %1155 = vrot.lane.b32.xlu0 %v438, 24
      %v1156 = vpop.permute.xlu0 %1155
      %1157 = vrot.lane.b32.xlu0 %v439, 24
      %v1158 = vpop.permute.xlu0 %1157
      %1159 = vrot.lane.b32.xlu0 %v440, 24
      %v1160 = vpop.permute.xlu0 %1159
      %1161 = vrot.lane.b32.xlu0 %v441, 24
      %v1162 = vpop.permute.xlu0 %1161
      %1163 = vrot.lane.b32.xlu0 %v1101, 24
      %v1164 = vpop.permute.xlu0 %1163
      %1165 = vrot.lane.b32.xlu0 %v1102, 24
      %v1166 = vpop.permute.xlu0 %1165
      %vm1199 = vcmask 261312
      %1200 = vst.msk [vmem:[#allocation2] sm:$0xff] %vm1199, %v1104
      %1201 = vst.msk [vmem:[#allocation2 + $0x8] sm:$0xff] %vm1199, %v1106
      %1202 = vst.msk [vmem:[#allocation2 + $0x10] sm:$0xff] %vm1199, %v1108
      %1203 = vst.msk [vmem:[#allocation2 + $0x18] sm:$0xff] %vm1199, %v1110
      %1204 = vst.msk [vmem:[#allocation2 + $0x20] sm:$0xff] %vm1199, %v1112
      %1205 = vst.msk [vmem:[#allocation2 + $0x28] sm:$0xff] %vm1199, %v1114
      %1206 = vst.msk [vmem:[#allocation2 + $0x30] sm:$0xff] %vm1199, %v1116
      %1207 = vst.msk [vmem:[#allocation2 + $0x38] sm:$0xff] %vm1199, %v1118
      %1208 = vst.msk [vmem:[#allocation2 + $0x40] sm:$0xff] %vm1199, %v1120
      %1209 = vst.msk [vmem:[#allocation2 + $0x48] sm:$0xff] %vm1199, %v1122
      %1210 = vst.msk [vmem:[#allocation2 + $0x50] sm:$0xff] %vm1199, %v1124
      %1211 = vst.msk [vmem:[#allocation2 + $0x58] sm:$0xff] %vm1199, %v1126
      %1212 = vst.msk [vmem:[#allocation2 + $0x60] sm:$0xff] %vm1199, %v1128
      %1213 = vst.msk [vmem:[#allocation2 + $0x68] sm:$0xff] %vm1199, %v1130
      %1214 = vst.msk [vmem:[#allocation2 + $0x70] sm:$0xff] %vm1199, %v1132
      %1215 = vst.msk [vmem:[#allocation2 + $0x78] sm:$0xff] %vm1199, %v1134
      %1216 = vst.msk [vmem:[#allocation2 + $0x80] sm:$0xff] %vm1199, %v1136
      %1217 = vst.msk [vmem:[#allocation2 + $0x88] sm:$0xff] %vm1199, %v1138
      %1218 = vst.msk [vmem:[#allocation2 + $0x90] sm:$0xff] %vm1199, %v1140
      %1219 = vst.msk [vmem:[#allocation2 + $0x98] sm:$0xff] %vm1199, %v1142
      %1220 = vst.msk [vmem:[#allocation2 + $0xa0] sm:$0xff] %vm1199, %v1144
      %1221 = vst.msk [vmem:[#allocation2 + $0xa8] sm:$0xff] %vm1199, %v1146
      %1222 = vst.msk [vmem:[#allocation2 + $0xb0] sm:$0xff] %vm1199, %v1148
      %1223 = vst.msk [vmem:[#allocation2 + $0xb8] sm:$0xff] %vm1199, %v1150
      %1224 = vst.msk [vmem:[#allocation2 + $0xc0] sm:$0xff] %vm1199, %v1152
      %1225 = vst.msk [vmem:[#allocation2 + $0xc8] sm:$0xff] %vm1199, %v1154
      %1226 = vst.msk [vmem:[#allocation2 + $0xd0] sm:$0xff] %vm1199, %v1156
      %1227 = vst.msk [vmem:[#allocation2 + $0xd8] sm:$0xff] %vm1199, %v1158
      %1228 = vst.msk [vmem:[#allocation2 + $0xe0] sm:$0xff] %vm1199, %v1160
      %1229 = vst.msk [vmem:[#allocation2 + $0xe8] sm:$0xff] %vm1199, %v1162
      %1230 = vst.msk [vmem:[#allocation2 + $0xf0] sm:$0xff] %vm1199, %v1164
      %1231 = vst.msk [vmem:[#allocation2 + $0xf8] sm:$0xff] %vm1199, %v1166
      %v1233 = vunpack.c.l.b16 %v277
      %v1234 = vpack.c.b16 %v1233, %v1233
      %v1236 = vshll.u32 %v1101, 16
      %v1238 = vrot.slane %v1236, 1
      %v1239 = vsel %vm510, %v765, %v1238
      %v1240 = vshrl.u32 %v1101, 16
      %v1242 = vor.u32 %v1240, %v1238
      %v1244 = vshll.u32 %v1102, 16
      %v1246 = vrot.slane %v1244, 1
      %v1247 = vsel %vm510, %v1242, %v1246
      %v1248 = vshrl.u32 %v1102, 16
      %v1250 = vor.u32 %v1248, %v1246
      %v1252 = vshll.u32 %v1234, 16
      %v1254 = vrot.slane %v1252, 1
      %v1255 = vsel %vm510, %v1250, %v1254
      %1256 = vrot.lane.b32.xlu0 %v538, 32
      %v1257 = vpop.permute.xlu0 %1256
      %1258 = vrot.lane.b32.xlu0 %v546, 32
      %v1259 = vpop.permute.xlu0 %1258
      %1260 = vrot.lane.b32.xlu0 %v554, 32
      %v1261 = vpop.permute.xlu0 %1260
      %1262 = vrot.lane.b32.xlu0 %v562, 32
      %v1263 = vpop.permute.xlu0 %1262
      %1264 = vrot.lane.b32.xlu0 %v570, 32
      %v1265 = vpop.permute.xlu0 %1264
      %1266 = vrot.lane.b32.xlu0 %v578, 32
      %v1267 = vpop.permute.xlu0 %1266
      %1268 = vrot.lane.b32.xlu0 %v586, 32
      %v1269 = vpop.permute.xlu0 %1268
      %1270 = vrot.lane.b32.xlu0 %v594, 32
      %v1271 = vpop.permute.xlu0 %1270
      %1272 = vrot.lane.b32.xlu0 %v602, 32
      %v1273 = vpop.permute.xlu0 %1272
      %1274 = vrot.lane.b32.xlu0 %v610, 32
      %v1275 = vpop.permute.xlu0 %1274
      %1276 = vrot.lane.b32.xlu0 %v618, 32
      %v1277 = vpop.permute.xlu0 %1276
      %1278 = vrot.lane.b32.xlu0 %v626, 32
      %v1279 = vpop.permute.xlu0 %1278
      %1280 = vrot.lane.b32.xlu0 %v634, 32
      %v1281 = vpop.permute.xlu0 %1280
      %1282 = vrot.lane.b32.xlu0 %v642, 32
      %v1283 = vpop.permute.xlu0 %1282
      %1284 = vrot.lane.b32.xlu0 %v650, 32
      %v1285 = vpop.permute.xlu0 %1284
      %1286 = vrot.lane.b32.xlu0 %v658, 32
      %v1287 = vpop.permute.xlu0 %1286
      %1288 = vrot.lane.b32.xlu0 %v666, 32
      %v1289 = vpop.permute.xlu0 %1288
      %1290 = vrot.lane.b32.xlu0 %v674, 32
      %v1291 = vpop.permute.xlu0 %1290
      %1292 = vrot.lane.b32.xlu0 %v682, 32
      %v1293 = vpop.permute.xlu0 %1292
      %1294 = vrot.lane.b32.xlu0 %v690, 32
      %v1295 = vpop.permute.xlu0 %1294
      %1296 = vrot.lane.b32.xlu0 %v698, 32
      %v1297 = vpop.permute.xlu0 %1296
      %1298 = vrot.lane.b32.xlu0 %v706, 32
      %v1299 = vpop.permute.xlu0 %1298
      %1300 = vrot.lane.b32.xlu0 %v714, 32
      %v1301 = vpop.permute.xlu0 %1300
      %1302 = vrot.lane.b32.xlu0 %v722, 32
      %v1303 = vpop.permute.xlu0 %1302
      %1304 = vrot.lane.b32.xlu0 %v730, 32
      %v1305 = vpop.permute.xlu0 %1304
      %1306 = vrot.lane.b32.xlu0 %v738, 32
      %v1307 = vpop.permute.xlu0 %1306
      %1308 = vrot.lane.b32.xlu0 %v746, 32
      %v1309 = vpop.permute.xlu0 %1308
      %1310 = vrot.lane.b32.xlu0 %v754, 32
      %v1311 = vpop.permute.xlu0 %1310
      %1312 = vrot.lane.b32.xlu0 %v762, 32
      %v1313 = vpop.permute.xlu0 %1312
      %1314 = vrot.lane.b32.xlu0 %v1239, 32
      %v1315 = vpop.permute.xlu0 %1314
      %1316 = vrot.lane.b32.xlu0 %v1247, 32
      %v1317 = vpop.permute.xlu0 %1316
      %1318 = vrot.lane.b32.xlu0 %v1255, 32
      %v1319 = vpop.permute.xlu0 %1318
      %vm1352 = vcmask 326912
      %1353 = vst.msk [vmem:[#allocation2] sm:$0xff] %vm1352, %v1257
      %1354 = vst.msk [vmem:[#allocation2 + $0x8] sm:$0xff] %vm1352, %v1259
      %1355 = vst.msk [vmem:[#allocation2 + $0x10] sm:$0xff] %vm1352, %v1261
      %1356 = vst.msk [vmem:[#allocation2 + $0x18] sm:$0xff] %vm1352, %v1263
      %1357 = vst.msk [vmem:[#allocation2 + $0x20] sm:$0xff] %vm1352, %v1265
      %1358 = vst.msk [vmem:[#allocation2 + $0x28] sm:$0xff] %vm1352, %v1267
      %1359 = vst.msk [vmem:[#allocation2 + $0x30] sm:$0xff] %vm1352, %v1269
      %1360 = vst.msk [vmem:[#allocation2 + $0x38] sm:$0xff] %vm1352, %v1271
      %1361 = vst.msk [vmem:[#allocation2 + $0x40] sm:$0xff] %vm1352, %v1273
      %1362 = vst.msk [vmem:[#allocation2 + $0x48] sm:$0xff] %vm1352, %v1275
      %1363 = vst.msk [vmem:[#allocation2 + $0x50] sm:$0xff] %vm1352, %v1277
      %1364 = vst.msk [vmem:[#allocation2 + $0x58] sm:$0xff] %vm1352, %v1279
      %1365 = vst.msk [vmem:[#allocation2 + $0x60] sm:$0xff] %vm1352, %v1281
      %1366 = vst.msk [vmem:[#allocation2 + $0x68] sm:$0xff] %vm1352, %v1283
      %1367 = vst.msk [vmem:[#allocation2 + $0x70] sm:$0xff] %vm1352, %v1285
      %1368 = vst.msk [vmem:[#allocation2 + $0x78] sm:$0xff] %vm1352, %v1287
      %1369 = vst.msk [vmem:[#allocation2 + $0x80] sm:$0xff] %vm1352, %v1289
      %1370 = vst.msk [vmem:[#allocation2 + $0x88] sm:$0xff] %vm1352, %v1291
      %1371 = vst.msk [vmem:[#allocation2 + $0x90] sm:$0xff] %vm1352, %v1293
      %1372 = vst.msk [vmem:[#allocation2 + $0x98] sm:$0xff] %vm1352, %v1295
      %1373 = vst.msk [vmem:[#allocation2 + $0xa0] sm:$0xff] %vm1352, %v1297
      %1374 = vst.msk [vmem:[#allocation2 + $0xa8] sm:$0xff] %vm1352, %v1299
      %1375 = vst.msk [vmem:[#allocation2 + $0xb0] sm:$0xff] %vm1352, %v1301
      %1376 = vst.msk [vmem:[#allocation2 + $0xb8] sm:$0xff] %vm1352, %v1303
      %1377 = vst.msk [vmem:[#allocation2 + $0xc0] sm:$0xff] %vm1352, %v1305
      %1378 = vst.msk [vmem:[#allocation2 + $0xc8] sm:$0xff] %vm1352, %v1307
      %1379 = vst.msk [vmem:[#allocation2 + $0xd0] sm:$0xff] %vm1352, %v1309
      %1380 = vst.msk [vmem:[#allocation2 + $0xd8] sm:$0xff] %vm1352, %v1311
      %1381 = vst.msk [vmem:[#allocation2 + $0xe0] sm:$0xff] %vm1352, %v1313
      %1382 = vst.msk [vmem:[#allocation2 + $0xe8] sm:$0xff] %vm1352, %v1315
      %1383 = vst.msk [vmem:[#allocation2 + $0xf0] sm:$0xff] %vm1352, %v1317
      %1384 = vst.msk [vmem:[#allocation2 + $0xf8] sm:$0xff] %vm1352, %v1319
      %v1385 = vrot.slane %v1101, 1
      %v1386 = vsel %vm900, %v962, %v1385
      %v1387 = vrot.slane %v1102, 1
      %v1388 = vsel %vm900, %v1385, %v1387
      %v1389 = vrot.slane %v1234, 1
      %v1390 = vsel %vm900, %v1387, %v1389
      %1391 = vrot.lane.b32.xlu0 %v907, 40
      %v1392 = vpop.permute.xlu0 %1391
      %1393 = vrot.lane.b32.xlu0 %v909, 40
      %v1394 = vpop.permute.xlu0 %1393
      %1395 = vrot.lane.b32.xlu0 %v911, 40
      %v1396 = vpop.permute.xlu0 %1395
      %1397 = vrot.lane.b32.xlu0 %v913, 40
      %v1398 = vpop.permute.xlu0 %1397
      %1399 = vrot.lane.b32.xlu0 %v915, 40
      %v1400 = vpop.permute.xlu0 %1399
      %1401 = vrot.lane.b32.xlu0 %v917, 40
      %v1402 = vpop.permute.xlu0 %1401
      %1403 = vrot.lane.b32.xlu0 %v919, 40
      %v1404 = vpop.permute.xlu0 %1403
      %1405 = vrot.lane.b32.xlu0 %v921, 40
      %v1406 = vpop.permute.xlu0 %1405
      %1407 = vrot.lane.b32.xlu0 %v923, 40
      %v1408 = vpop.permute.xlu0 %1407
      %1409 = vrot.lane.b32.xlu0 %v925, 40
      %v1410 = vpop.permute.xlu0 %1409
      %1411 = vrot.lane.b32.xlu0 %v927, 40
      %v1412 = vpop.permute.xlu0 %1411
      %1413 = vrot.lane.b32.xlu0 %v929, 40
      %v1414 = vpop.permute.xlu0 %1413
      %1415 = vrot.lane.b32.xlu0 %v931, 40
      %v1416 = vpop.permute.xlu0 %1415
      %1417 = vrot.lane.b32.xlu0 %v933, 40
      %v1418 = vpop.permute.xlu0 %1417
      %1419 = vrot.lane.b32.xlu0 %v935, 40
      %v1420 = vpop.permute.xlu0 %1419
      %1421 = vrot.lane.b32.xlu0 %v937, 40
      %v1422 = vpop.permute.xlu0 %1421
      %1423 = vrot.lane.b32.xlu0 %v939, 40
      %v1424 = vpop.permute.xlu0 %1423
      %1425 = vrot.lane.b32.xlu0 %v941, 40
      %v1426 = vpop.permute.xlu0 %1425
      %1427 = vrot.lane.b32.xlu0 %v943, 40
      %v1428 = vpop.permute.xlu0 %1427
      %1429 = vrot.lane.b32.xlu0 %v945, 40
      %v1430 = vpop.permute.xlu0 %1429
      %1431 = vrot.lane.b32.xlu0 %v947, 40
      %v1432 = vpop.permute.xlu0 %1431
      %1433 = vrot.lane.b32.xlu0 %v949, 40
      %v1434 = vpop.permute.xlu0 %1433
      %1435 = vrot.lane.b32.xlu0 %v951, 40
      %v1436 = vpop.permute.xlu0 %1435
      %1437 = vrot.lane.b32.xlu0 %v953, 40
      %v1438 = vpop.permute.xlu0 %1437
      %1439 = vrot.lane.b32.xlu0 %v955, 40
      %v1440 = vpop.permute.xlu0 %1439
      %1441 = vrot.lane.b32.xlu0 %v957, 40
      %v1442 = vpop.permute.xlu0 %1441
      %1443 = vrot.lane.b32.xlu0 %v959, 40
      %v1444 = vpop.permute.xlu0 %1443
      %1445 = vrot.lane.b32.xlu0 %v961, 40
      %v1446 = vpop.permute.xlu0 %1445
      %1447 = vrot.lane.b32.xlu0 %v963, 40
      %v1448 = vpop.permute.xlu0 %1447
      %1449 = vrot.lane.b32.xlu0 %v1386, 40
      %v1450 = vpop.permute.xlu0 %1449
      %1451 = vrot.lane.b32.xlu0 %v1388, 40
      %v1452 = vpop.permute.xlu0 %1451
      %1453 = vrot.lane.b32.xlu0 %v1390, 40
      %v1454 = vpop.permute.xlu0 %1453
      %vm1487 = vcmask 392512
      %1488 = vst.msk [vmem:[#allocation2] sm:$0xff] %vm1487, %v1392
      %1489 = vst.msk [vmem:[#allocation2 + $0x8] sm:$0xff] %vm1487, %v1394
      %1490 = vst.msk [vmem:[#allocation2 + $0x10] sm:$0xff] %vm1487, %v1396
      %1491 = vst.msk [vmem:[#allocation2 + $0x18] sm:$0xff] %vm1487, %v1398
      %1492 = vst.msk [vmem:[#allocation2 + $0x20] sm:$0xff] %vm1487, %v1400
      %1493 = vst.msk [vmem:[#allocation2 + $0x28] sm:$0xff] %vm1487, %v1402
      %1494 = vst.msk [vmem:[#allocation2 + $0x30] sm:$0xff] %vm1487, %v1404
      %1495 = vst.msk [vmem:[#allocation2 + $0x38] sm:$0xff] %vm1487, %v1406
      %1496 = vst.msk [vmem:[#allocation2 + $0x40] sm:$0xff] %vm1487, %v1408
      %1497 = vst.msk [vmem:[#allocation2 + $0x48] sm:$0xff] %vm1487, %v1410
      %1498 = vst.msk [vmem:[#allocation2 + $0x50] sm:$0xff] %vm1487, %v1412
      %1499 = vst.msk [vmem:[#allocation2 + $0x58] sm:$0xff] %vm1487, %v1414
      %1500 = vst.msk [vmem:[#allocation2 + $0x60] sm:$0xff] %vm1487, %v1416
      %1501 = vst.msk [vmem:[#allocation2 + $0x68] sm:$0xff] %vm1487, %v1418
      %1502 = vst.msk [vmem:[#allocation2 + $0x70] sm:$0xff] %vm1487, %v1420
      %1503 = vst.msk [vmem:[#allocation2 + $0x78] sm:$0xff] %vm1487, %v1422
      %1504 = vst.msk [vmem:[#allocation2 + $0x80] sm:$0xff] %vm1487, %v1424
      %1505 = vst.msk [vmem:[#allocation2 + $0x88] sm:$0xff] %vm1487, %v1426
      %1506 = vst.msk [vmem:[#allocation2 + $0x90] sm:$0xff] %vm1487, %v1428
      %1507 = vst.msk [vmem:[#allocation2 + $0x98] sm:$0xff] %vm1487, %v1430
      %1508 = vst.msk [vmem:[#allocation2 + $0xa0] sm:$0xff] %vm1487, %v1432
      %1509 = vst.msk [vmem:[#allocation2 + $0xa8] sm:$0xff] %vm1487, %v1434
      %1510 = vst.msk [vmem:[#allocation2 + $0xb0] sm:$0xff] %vm1487, %v1436
      %1511 = vst.msk [vmem:[#allocation2 + $0xb8] sm:$0xff] %vm1487, %v1438
      %1512 = vst.msk [vmem:[#allocation2 + $0xc0] sm:$0xff] %vm1487, %v1440
      %1513 = vst.msk [vmem:[#allocation2 + $0xc8] sm:$0xff] %vm1487, %v1442
      %1514 = vst.msk [vmem:[#allocation2 + $0xd0] sm:$0xff] %vm1487, %v1444
      %1515 = vst.msk [vmem:[#allocation2 + $0xd8] sm:$0xff] %vm1487, %v1446
      %1516 = vst.msk [vmem:[#allocation2 + $0xe0] sm:$0xff] %vm1487, %v1448
      %1517 = vst.msk [vmem:[#allocation2 + $0xe8] sm:$0xff] %vm1487, %v1450
      %1518 = vst.msk [vmem:[#allocation2 + $0xf0] sm:$0xff] %vm1487, %v1452
      %1519 = vst.msk [vmem:[#allocation2 + $0xf8] sm:$0xff] %vm1487, %v1454
      %v1523 = vunpack.c.l.b16 %v278
      %v1524 = vunpack.c.l.b16 %v279
      %v1525 = vunpack.c.l.b16 %v280
      %v1526 = vpack.c.b16 %v1523, %v1233
      %v1527 = vpack.c.b16 %v1525, %v1524
      %1528 = vrot.lane.b32.xlu0 %v414, 48
      %v1529 = vpop.permute.xlu0 %1528
      %1530 = vrot.lane.b32.xlu0 %v415, 48
      %v1531 = vpop.permute.xlu0 %1530
      %1532 = vrot.lane.b32.xlu0 %v416, 48
      %v1533 = vpop.permute.xlu0 %1532
      %1534 = vrot.lane.b32.xlu0 %v417, 48
      %v1535 = vpop.permute.xlu0 %1534
      %1536 = vrot.lane.b32.xlu0 %v418, 48
      %v1537 = vpop.permute.xlu0 %1536
      %1538 = vrot.lane.b32.xlu0 %v419, 48
      %v1539 = vpop.permute.xlu0 %1538
      %1540 = vrot.lane.b32.xlu0 %v420, 48
      %v1541 = vpop.permute.xlu0 %1540
      %1542 = vrot.lane.b32.xlu0 %v421, 48
      %v1543 = vpop.permute.xlu0 %1542
      %1544 = vrot.lane.b32.xlu0 %v422, 48
      %v1545 = vpop.permute.xlu0 %1544
      %1546 = vrot.lane.b32.xlu0 %v423, 48
      %v1547 = vpop.permute.xlu0 %1546
      %1548 = vrot.lane.b32.xlu0 %v424, 48
      %v1549 = vpop.permute.xlu0 %1548
      %1550 = vrot.lane.b32.xlu0 %v425, 48
      %v1551 = vpop.permute.xlu0 %1550
      %1552 = vrot.lane.b32.xlu0 %v426, 48
      %v1553 = vpop.permute.xlu0 %1552
      %1554 = vrot.lane.b32.xlu0 %v427, 48
      %v1555 = vpop.permute.xlu0 %1554
      %1556 = vrot.lane.b32.xlu0 %v428, 48
      %v1557 = vpop.permute.xlu0 %1556
      %1558 = vrot.lane.b32.xlu0 %v429, 48
      %v1559 = vpop.permute.xlu0 %1558
      %1560 = vrot.lane.b32.xlu0 %v430, 48
      %v1561 = vpop.permute.xlu0 %1560
      %1562 = vrot.lane.b32.xlu0 %v431, 48
      %v1563 = vpop.permute.xlu0 %1562
      %1564 = vrot.lane.b32.xlu0 %v432, 48
      %v1565 = vpop.permute.xlu0 %1564
      %1566 = vrot.lane.b32.xlu0 %v433, 48
      %v1567 = vpop.permute.xlu0 %1566
      %1568 = vrot.lane.b32.xlu0 %v434, 48
      %v1569 = vpop.permute.xlu0 %1568
      %1570 = vrot.lane.b32.xlu0 %v435, 48
      %v1571 = vpop.permute.xlu0 %1570
      %1572 = vrot.lane.b32.xlu0 %v436, 48
      %v1573 = vpop.permute.xlu0 %1572
      %1574 = vrot.lane.b32.xlu0 %v437, 48
      %v1575 = vpop.permute.xlu0 %1574
      %1576 = vrot.lane.b32.xlu0 %v438, 48
      %v1577 = vpop.permute.xlu0 %1576
      %1578 = vrot.lane.b32.xlu0 %v439, 48
      %v1579 = vpop.permute.xlu0 %1578
      %1580 = vrot.lane.b32.xlu0 %v440, 48
      %v1581 = vpop.permute.xlu0 %1580
      %1582 = vrot.lane.b32.xlu0 %v441, 48
      %v1583 = vpop.permute.xlu0 %1582
      %1584 = vrot.lane.b32.xlu0 %v1101, 48
      %v1585 = vpop.permute.xlu0 %1584
      %1586 = vrot.lane.b32.xlu0 %v1102, 48
      %v1587 = vpop.permute.xlu0 %1586
      %1588 = vrot.lane.b32.xlu0 %v1526, 48
      %v1589 = vpop.permute.xlu0 %1588
      %1590 = vrot.lane.b32.xlu0 %v1527, 48
      %v1591 = vpop.permute.xlu0 %1590
      %vm1624 = vcmask 458112
      %1625 = vst.msk [vmem:[#allocation2] sm:$0xff] %vm1624, %v1529
      %1626 = vst.msk [vmem:[#allocation2 + $0x8] sm:$0xff] %vm1624, %v1531
      %1627 = vst.msk [vmem:[#allocation2 + $0x10] sm:$0xff] %vm1624, %v1533
      %1628 = vst.msk [vmem:[#allocation2 + $0x18] sm:$0xff] %vm1624, %v1535
      %1629 = vst.msk [vmem:[#allocation2 + $0x20] sm:$0xff] %vm1624, %v1537
      %1630 = vst.msk [vmem:[#allocation2 + $0x28] sm:$0xff] %vm1624, %v1539
      %1631 = vst.msk [vmem:[#allocation2 + $0x30] sm:$0xff] %vm1624, %v1541
      %1632 = vst.msk [vmem:[#allocation2 + $0x38] sm:$0xff] %vm1624, %v1543
      %1633 = vst.msk [vmem:[#allocation2 + $0x40] sm:$0xff] %vm1624, %v1545
      %1634 = vst.msk [vmem:[#allocation2 + $0x48] sm:$0xff] %vm1624, %v1547
      %1635 = vst.msk [vmem:[#allocation2 + $0x50] sm:$0xff] %vm1624, %v1549
      %1636 = vst.msk [vmem:[#allocation2 + $0x58] sm:$0xff] %vm1624, %v1551
      %1637 = vst.msk [vmem:[#allocation2 + $0x60] sm:$0xff] %vm1624, %v1553
      %1638 = vst.msk [vmem:[#allocation2 + $0x68] sm:$0xff] %vm1624, %v1555
      %1639 = vst.msk [vmem:[#allocation2 + $0x70] sm:$0xff] %vm1624, %v1557
      %1640 = vst.msk [vmem:[#allocation2 + $0x78] sm:$0xff] %vm1624, %v1559
      %1641 = vst.msk [vmem:[#allocation2 + $0x80] sm:$0xff] %vm1624, %v1561
      %1642 = vst.msk [vmem:[#allocation2 + $0x88] sm:$0xff] %vm1624, %v1563
      %1643 = vst.msk [vmem:[#allocation2 + $0x90] sm:$0xff] %vm1624, %v1565
      %1644 = vst.msk [vmem:[#allocation2 + $0x98] sm:$0xff] %vm1624, %v1567
      %1645 = vst.msk [vmem:[#allocation2 + $0xa0] sm:$0xff] %vm1624, %v1569
      %1646 = vst.msk [vmem:[#allocation2 + $0xa8] sm:$0xff] %vm1624, %v1571
      %1647 = vst.msk [vmem:[#allocation2 + $0xb0] sm:$0xff] %vm1624, %v1573
      %1648 = vst.msk [vmem:[#allocation2 + $0xb8] sm:$0xff] %vm1624, %v1575
      %1649 = vst.msk [vmem:[#allocation2 + $0xc0] sm:$0xff] %vm1624, %v1577
      %1650 = vst.msk [vmem:[#allocation2 + $0xc8] sm:$0xff] %vm1624, %v1579
      %1651 = vst.msk [vmem:[#allocation2 + $0xd0] sm:$0xff] %vm1624, %v1581
      %1652 = vst.msk [vmem:[#allocation2 + $0xd8] sm:$0xff] %vm1624, %v1583
      %1653 = vst.msk [vmem:[#allocation2 + $0xe0] sm:$0xff] %vm1624, %v1585
      %1654 = vst.msk [vmem:[#allocation2 + $0xe8] sm:$0xff] %vm1624, %v1587
      %1655 = vst.msk [vmem:[#allocation2 + $0xf0] sm:$0xff] %vm1624, %v1589
      %1656 = vst.msk [vmem:[#allocation2 + $0xf8] sm:$0xff] %vm1624, %v1591
      %v1658 = vunpack.c.l.b16 %v281
      %v1659 = vpack.c.b16 %v1658, %v1658
      %v1661 = vshll.u32 %v1526, 16
      %v1663 = vrot.slane %v1661, 1
      %v1664 = vsel %vm510, %v1250, %v1663
      %v1665 = vshrl.u32 %v1526, 16
      %v1667 = vor.u32 %v1665, %v1663
      %v1669 = vshll.u32 %v1527, 16
      %v1671 = vrot.slane %v1669, 1
      %v1672 = vsel %vm510, %v1667, %v1671
      %v1673 = vshrl.u32 %v1527, 16
      %v1675 = vor.u32 %v1673, %v1671
      %v1677 = vshll.u32 %v1659, 16
      %v1679 = vrot.slane %v1677, 1
      %v1680 = vsel %vm510, %v1675, %v1679
      %1681 = vrot.lane.b32.xlu0 %v554, 56
      %v1682 = vpop.permute.xlu0 %1681
      %1683 = vrot.lane.b32.xlu0 %v562, 56
      %v1684 = vpop.permute.xlu0 %1683
      %1685 = vrot.lane.b32.xlu0 %v570, 56
      %v1686 = vpop.permute.xlu0 %1685
      %1687 = vrot.lane.b32.xlu0 %v578, 56
      %v1688 = vpop.permute.xlu0 %1687
      %1689 = vrot.lane.b32.xlu0 %v586, 56
      %v1690 = vpop.permute.xlu0 %1689
      %1691 = vrot.lane.b32.xlu0 %v594, 56
      %v1692 = vpop.permute.xlu0 %1691
      %1693 = vrot.lane.b32.xlu0 %v602, 56
      %v1694 = vpop.permute.xlu0 %1693
      %1695 = vrot.lane.b32.xlu0 %v610, 56
      %v1696 = vpop.permute.xlu0 %1695
      %1697 = vrot.lane.b32.xlu0 %v618, 56
      %v1698 = vpop.permute.xlu0 %1697
      %1699 = vrot.lane.b32.xlu0 %v626, 56
      %v1700 = vpop.permute.xlu0 %1699
      %1701 = vrot.lane.b32.xlu0 %v634, 56
      %v1702 = vpop.permute.xlu0 %1701
      %1703 = vrot.lane.b32.xlu0 %v642, 56
      %v1704 = vpop.permute.xlu0 %1703
      %1705 = vrot.lane.b32.xlu0 %v650, 56
      %v1706 = vpop.permute.xlu0 %1705
      %1707 = vrot.lane.b32.xlu0 %v658, 56
      %v1708 = vpop.permute.xlu0 %1707
      %1709 = vrot.lane.b32.xlu0 %v666, 56
      %v1710 = vpop.permute.xlu0 %1709
      %1711 = vrot.lane.b32.xlu0 %v674, 56
      %v1712 = vpop.permute.xlu0 %1711
      %1713 = vrot.lane.b32.xlu0 %v682, 56
      %v1714 = vpop.permute.xlu0 %1713
      %1715 = vrot.lane.b32.xlu0 %v690, 56
      %v1716 = vpop.permute.xlu0 %1715
      %1717 = vrot.lane.b32.xlu0 %v698, 56
      %v1718 = vpop.permute.xlu0 %1717
      %1719 = vrot.lane.b32.xlu0 %v706, 56
      %v1720 = vpop.permute.xlu0 %1719
      %1721 = vrot.lane.b32.xlu0 %v714, 56
      %v1722 = vpop.permute.xlu0 %1721
      %1723 = vrot.lane.b32.xlu0 %v722, 56
      %v1724 = vpop.permute.xlu0 %1723
      %1725 = vrot.lane.b32.xlu0 %v730, 56
      %v1726 = vpop.permute.xlu0 %1725
      %1727 = vrot.lane.b32.xlu0 %v738, 56
      %v1728 = vpop.permute.xlu0 %1727
      %1729 = vrot.lane.b32.xlu0 %v746, 56
      %v1730 = vpop.permute.xlu0 %1729
      %1731 = vrot.lane.b32.xlu0 %v754, 56
      %v1732 = vpop.permute.xlu0 %1731
      %1733 = vrot.lane.b32.xlu0 %v762, 56
      %v1734 = vpop.permute.xlu0 %1733
      %1735 = vrot.lane.b32.xlu0 %v1239, 56
      %v1736 = vpop.permute.xlu0 %1735
      %1737 = vrot.lane.b32.xlu0 %v1247, 56
      %v1738 = vpop.permute.xlu0 %1737
      %1739 = vrot.lane.b32.xlu0 %v1664, 56
      %v1740 = vpop.permute.xlu0 %1739
      %1741 = vrot.lane.b32.xlu0 %v1672, 56
      %v1742 = vpop.permute.xlu0 %1741
      %1743 = vrot.lane.b32.xlu0 %v1680, 56
      %v1744 = vpop.permute.xlu0 %1743
      %vm1777 = vcmask 523712
      %1778 = vst.msk [vmem:[#allocation2] sm:$0xff] %vm1777, %v1682
      %1779 = vst.msk [vmem:[#allocation2 + $0x8] sm:$0xff] %vm1777, %v1684
      %1780 = vst.msk [vmem:[#allocation2 + $0x10] sm:$0xff] %vm1777, %v1686
      %1781 = vst.msk [vmem:[#allocation2 + $0x18] sm:$0xff] %vm1777, %v1688
      %1782 = vst.msk [vmem:[#allocation2 + $0x20] sm:$0xff] %vm1777, %v1690
      %1783 = vst.msk [vmem:[#allocation2 + $0x28] sm:$0xff] %vm1777, %v1692
      %1784 = vst.msk [vmem:[#allocation2 + $0x30] sm:$0xff] %vm1777, %v1694
      %1785 = vst.msk [vmem:[#allocation2 + $0x38] sm:$0xff] %vm1777, %v1696
      %1786 = vst.msk [vmem:[#allocation2 + $0x40] sm:$0xff] %vm1777, %v1698
      %1787 = vst.msk [vmem:[#allocation2 + $0x48] sm:$0xff] %vm1777, %v1700
      %1788 = vst.msk [vmem:[#allocation2 + $0x50] sm:$0xff] %vm1777, %v1702
      %1789 = vst.msk [vmem:[#allocation2 + $0x58] sm:$0xff] %vm1777, %v1704
      %1790 = vst.msk [vmem:[#allocation2 + $0x60] sm:$0xff] %vm1777, %v1706
      %1791 = vst.msk [vmem:[#allocation2 + $0x68] sm:$0xff] %vm1777, %v1708
      %1792 = vst.msk [vmem:[#allocation2 + $0x70] sm:$0xff] %vm1777, %v1710
      %1793 = vst.msk [vmem:[#allocation2 + $0x78] sm:$0xff] %vm1777, %v1712
      %1794 = vst.msk [vmem:[#allocation2 + $0x80] sm:$0xff] %vm1777, %v1714
      %1795 = vst.msk [vmem:[#allocation2 + $0x88] sm:$0xff] %vm1777, %v1716
      %1796 = vst.msk [vmem:[#allocation2 + $0x90] sm:$0xff] %vm1777, %v1718
      %1797 = vst.msk [vmem:[#allocation2 + $0x98] sm:$0xff] %vm1777, %v1720
      %1798 = vst.msk [vmem:[#allocation2 + $0xa0] sm:$0xff] %vm1777, %v1722
      %1799 = vst.msk [vmem:[#allocation2 + $0xa8] sm:$0xff] %vm1777, %v1724
      %1800 = vst.msk [vmem:[#allocation2 + $0xb0] sm:$0xff] %vm1777, %v1726
      %1801 = vst.msk [vmem:[#allocation2 + $0xb8] sm:$0xff] %vm1777, %v1728
      %1802 = vst.msk [vmem:[#allocation2 + $0xc0] sm:$0xff] %vm1777, %v1730
      %1803 = vst.msk [vmem:[#allocation2 + $0xc8] sm:$0xff] %vm1777, %v1732
      %1804 = vst.msk [vmem:[#allocation2 + $0xd0] sm:$0xff] %vm1777, %v1734
      %1805 = vst.msk [vmem:[#allocation2 + $0xd8] sm:$0xff] %vm1777, %v1736
      %1806 = vst.msk [vmem:[#allocation2 + $0xe0] sm:$0xff] %vm1777, %v1738
      %1807 = vst.msk [vmem:[#allocation2 + $0xe8] sm:$0xff] %vm1777, %v1740
      %1808 = vst.msk [vmem:[#allocation2 + $0xf0] sm:$0xff] %vm1777, %v1742
      %1809 = vst.msk [vmem:[#allocation2 + $0xf8] sm:$0xff] %vm1777, %v1744
      %v1810 = vrot.slane %v1526, 1
      %v1811 = vsel %vm900, %v1387, %v1810
      %v1812 = vrot.slane %v1527, 1
      %v1813 = vsel %vm900, %v1810, %v1812
      %v1814 = vrot.slane %v1659, 1
      %v1815 = vsel %vm900, %v1812, %v1814
      %1816 = vrot.lane.b32.xlu0 %v911, 64
      %v1817 = vpop.permute.xlu0 %1816
      %1818 = vrot.lane.b32.xlu0 %v913, 64
      %v1819 = vpop.permute.xlu0 %1818
      %1820 = vrot.lane.b32.xlu0 %v915, 64
      %v1821 = vpop.permute.xlu0 %1820
      %1822 = vrot.lane.b32.xlu0 %v917, 64
      %v1823 = vpop.permute.xlu0 %1822
      %1824 = vrot.lane.b32.xlu0 %v919, 64
      %v1825 = vpop.permute.xlu0 %1824
      %1826 = vrot.lane.b32.xlu0 %v921, 64
      %v1827 = vpop.permute.xlu0 %1826
      %1828 = vrot.lane.b32.xlu0 %v923, 64
      %v1829 = vpop.permute.xlu0 %1828
      %1830 = vrot.lane.b32.xlu0 %v925, 64
      %v1831 = vpop.permute.xlu0 %1830
      %1832 = vrot.lane.b32.xlu0 %v927, 64
      %v1833 = vpop.permute.xlu0 %1832
      %1834 = vrot.lane.b32.xlu0 %v929, 64
      %v1835 = vpop.permute.xlu0 %1834
      %1836 = vrot.lane.b32.xlu0 %v931, 64
      %v1837 = vpop.permute.xlu0 %1836
      %1838 = vrot.lane.b32.xlu0 %v933, 64
      %v1839 = vpop.permute.xlu0 %1838
      %1840 = vrot.lane.b32.xlu0 %v935, 64
      %v1841 = vpop.permute.xlu0 %1840
      %1842 = vrot.lane.b32.xlu0 %v937, 64
      %v1843 = vpop.permute.xlu0 %1842
      %1844 = vrot.lane.b32.xlu0 %v939, 64
      %v1845 = vpop.permute.xlu0 %1844
      %1846 = vrot.lane.b32.xlu0 %v941, 64
      %v1847 = vpop.permute.xlu0 %1846
      %1848 = vrot.lane.b32.xlu0 %v943, 64
      %v1849 = vpop.permute.xlu0 %1848
      %1850 = vrot.lane.b32.xlu0 %v945, 64
      %v1851 = vpop.permute.xlu0 %1850
      %1852 = vrot.lane.b32.xlu0 %v947, 64
      %v1853 = vpop.permute.xlu0 %1852
      %1854 = vrot.lane.b32.xlu0 %v949, 64
      %v1855 = vpop.permute.xlu0 %1854
      %1856 = vrot.lane.b32.xlu0 %v951, 64
      %v1857 = vpop.permute.xlu0 %1856
      %1858 = vrot.lane.b32.xlu0 %v953, 64
      %v1859 = vpop.permute.xlu0 %1858
      %1860 = vrot.lane.b32.xlu0 %v955, 64
      %v1861 = vpop.permute.xlu0 %1860
      %1862 = vrot.lane.b32.xlu0 %v957, 64
      %v1863 = vpop.permute.xlu0 %1862
      %1864 = vrot.lane.b32.xlu0 %v959, 64
      %v1865 = vpop.permute.xlu0 %1864
      %1866 = vrot.lane.b32.xlu0 %v961, 64
      %v1867 = vpop.permute.xlu0 %1866
      %1868 = vrot.lane.b32.xlu0 %v963, 64
      %v1869 = vpop.permute.xlu0 %1868
      %1870 = vrot.lane.b32.xlu0 %v1386, 64
      %v1871 = vpop.permute.xlu0 %1870
      %1872 = vrot.lane.b32.xlu0 %v1388, 64
      %v1873 = vpop.permute.xlu0 %1872
      %1874 = vrot.lane.b32.xlu0 %v1811, 64
      %v1875 = vpop.permute.xlu0 %1874
      %1876 = vrot.lane.b32.xlu0 %v1813, 64
      %v1877 = vpop.permute.xlu0 %1876
      %1878 = vrot.lane.b32.xlu0 %v1815, 64
      %v1879 = vpop.permute.xlu0 %1878
      %vm1912 = vcmask 589312
      %1913 = vst.msk [vmem:[#allocation2] sm:$0xff] %vm1912, %v1817
      %1914 = vst.msk [vmem:[#allocation2 + $0x8] sm:$0xff] %vm1912, %v1819
      %1915 = vst.msk [vmem:[#allocation2 + $0x10] sm:$0xff] %vm1912, %v1821
      %1916 = vst.msk [vmem:[#allocation2 + $0x18] sm:$0xff] %vm1912, %v1823
      %1917 = vst.msk [vmem:[#allocation2 + $0x20] sm:$0xff] %vm1912, %v1825
      %1918 = vst.msk [vmem:[#allocation2 + $0x28] sm:$0xff] %vm1912, %v1827
      %1919 = vst.msk [vmem:[#allocation2 + $0x30] sm:$0xff] %vm1912, %v1829
      %1920 = vst.msk [vmem:[#allocation2 + $0x38] sm:$0xff] %vm1912, %v1831
      %1921 = vst.msk [vmem:[#allocation2 + $0x40] sm:$0xff] %vm1912, %v1833
      %1922 = vst.msk [vmem:[#allocation2 + $0x48] sm:$0xff] %vm1912, %v1835
      %1923 = vst.msk [vmem:[#allocation2 + $0x50] sm:$0xff] %vm1912, %v1837
      %1924 = vst.msk [vmem:[#allocation2 + $0x58] sm:$0xff] %vm1912, %v1839
      %1925 = vst.msk [vmem:[#allocation2 + $0x60] sm:$0xff] %vm1912, %v1841
      %1926 = vst.msk [vmem:[#allocation2 + $0x68] sm:$0xff] %vm1912, %v1843
      %1927 = vst.msk [vmem:[#allocation2 + $0x70] sm:$0xff] %vm1912, %v1845
      %1928 = vst.msk [vmem:[#allocation2 + $0x78] sm:$0xff] %vm1912, %v1847
      %1929 = vst.msk [vmem:[#allocation2 + $0x80] sm:$0xff] %vm1912, %v1849
      %1930 = vst.msk [vmem:[#allocation2 + $0x88] sm:$0xff] %vm1912, %v1851
      %1931 = vst.msk [vmem:[#allocation2 + $0x90] sm:$0xff] %vm1912, %v1853
      %1932 = vst.msk [vmem:[#allocation2 + $0x98] sm:$0xff] %vm1912, %v1855
      %1933 = vst.msk [vmem:[#allocation2 + $0xa0] sm:$0xff] %vm1912, %v1857
      %1934 = vst.msk [vmem:[#allocation2 + $0xa8] sm:$0xff] %vm1912, %v1859
      %1935 = vst.msk [vmem:[#allocation2 + $0xb0] sm:$0xff] %vm1912, %v1861
      %1936 = vst.msk [vmem:[#allocation2 + $0xb8] sm:$0xff] %vm1912, %v1863
      %1937 = vst.msk [vmem:[#allocation2 + $0xc0] sm:$0xff] %vm1912, %v1865
      %1938 = vst.msk [vmem:[#allocation2 + $0xc8] sm:$0xff] %vm1912, %v1867
      %1939 = vst.msk [vmem:[#allocation2 + $0xd0] sm:$0xff] %vm1912, %v1869
      %1940 = vst.msk [vmem:[#allocation2 + $0xd8] sm:$0xff] %vm1912, %v1871
      %1941 = vst.msk [vmem:[#allocation2 + $0xe0] sm:$0xff] %vm1912, %v1873
      %1942 = vst.msk [vmem:[#allocation2 + $0xe8] sm:$0xff] %vm1912, %v1875
      %1943 = vst.msk [vmem:[#allocation2 + $0xf0] sm:$0xff] %vm1912, %v1877
      %1944 = vst.msk [vmem:[#allocation2 + $0xf8] sm:$0xff] %vm1912, %v1879
      %v1945 = vld [vmem:[#allocation2] sm:$0xff]
      %v1946 = vld [vmem:[#allocation2 + $0x8] sm:$0xff]
      %v1947 = vld [vmem:[#allocation2 + $0x10] sm:$0xff]
      %v1948 = vld [vmem:[#allocation2 + $0x18] sm:$0xff]
      %v1949 = vld [vmem:[#allocation2 + $0x20] sm:$0xff]
      %v1950 = vld [vmem:[#allocation2 + $0x28] sm:$0xff]
      %v1951 = vld [vmem:[#allocation2 + $0x30] sm:$0xff]
      %v1952 = vld [vmem:[#allocation2 + $0x38] sm:$0xff]
      %v1953 = vld [vmem:[#allocation2 + $0x40] sm:$0xff]
      %v1954 = vld [vmem:[#allocation2 + $0x48] sm:$0xff]
      %v1955 = vld [vmem:[#allocation2 + $0x50] sm:$0xff]
      %v1956 = vld [vmem:[#allocation2 + $0x58] sm:$0xff]
      %v1957 = vld [vmem:[#allocation2 + $0x60] sm:$0xff]
      %v1958 = vld [vmem:[#allocation2 + $0x68] sm:$0xff]
      %v1959 = vld [vmem:[#allocation2 + $0x70] sm:$0xff]
      %v1960 = vld [vmem:[#allocation2 + $0x78] sm:$0xff]
      %v1961 = vld [vmem:[#allocation2 + $0x80] sm:$0xff]
      %v1962 = vld [vmem:[#allocation2 + $0x88] sm:$0xff]
      %v1963 = vld [vmem:[#allocation2 + $0x90] sm:$0xff]
      %v1964 = vld [vmem:[#allocation2 + $0x98] sm:$0xff]
      %v1965 = vld [vmem:[#allocation2 + $0xa0] sm:$0xff]
      %v1966 = vld [vmem:[#allocation2 + $0xa8] sm:$0xff]
      %v1967 = vld [vmem:[#allocation2 + $0xb0] sm:$0xff]
      %v1968 = vld [vmem:[#allocation2 + $0xb8] sm:$0xff]
      %v1969 = vld [vmem:[#allocation2 + $0xc0] sm:$0xff]
      %v1970 = vld [vmem:[#allocation2 + $0xc8] sm:$0xff]
      %v1971 = vld [vmem:[#allocation2 + $0xd0] sm:$0xff]
      %v1972 = vld [vmem:[#allocation2 + $0xd8] sm:$0xff]
      %v1973 = vld [vmem:[#allocation2 + $0xe0] sm:$0xff]
      %v1974 = vld [vmem:[#allocation2 + $0xe8] sm:$0xff]
      %v1975 = vld [vmem:[#allocation2 + $0xf0] sm:$0xff]
      %v1976 = vld [vmem:[#allocation2 + $0xf8] sm:$0xff]
      %v1977 = vld [vmem:[%s190] sm:$0xf]
      %v1978 = vld [vmem:[%s190 + $0x4] sm:$0xf]
      %v1979 = vld [vmem:[%s190 + $0x8] sm:$0xf]
      %v1980 = vld [vmem:[%s190 + $0xc] sm:$0xf]
      %v1981 = vld [vmem:[%s190 + $0x10] sm:$0xf]
      %v1982 = vld [vmem:[%s190 + $0x14] sm:$0xf]
      %v1983 = vld [vmem:[%s190 + $0x18] sm:$0xf]
      %v1984 = vld [vmem:[%s190 + $0x1c] sm:$0xf]
      %v1985 = vld [vmem:[%s190 + $0x20] sm:$0xf]
      %v1986 = vld [vmem:[%s193] sm:$0x1]
      %v1988 = vlaneseq
      %v1989 = vshrl.u32 %v1988, 7
      %v1990 = vsub.s32 0, %v1989
      %v1991 = vrot.slane %v1986, %v1990
      %v2002 = vunpack.c.l.b16 %v1977
      %v2003 = vunpack.c.l.b16 %v1978
      %v2004 = vunpack.c.l.b16 %v1979
      %v2005 = vunpack.c.l.b16 %v1980
      %v2006 = vunpack.c.l.b16 %v1981
      %v2007 = vunpack.c.l.b16 %v1982
      %v2008 = vunpack.c.l.b16 %v1983
      %v2009 = vunpack.c.l.b16 %v1984
      %v2010 = vunpack.c.l.b16 %v1985
      %v2011 = vpack.c.b16 %v2003, %v2002
      %v2012 = vpack.c.b16 %v2005, %v2004
      %v2013 = vpack.c.b16 %v2007, %v2006
      %v2014 = vpack.c.b16 %v2009, %v2008
      %v2015 = vpack.c.b16 %v2010, %v2010
      %vm2020 = vcmask 588800
      %v2022 = vsel %vm2020, %v1945, 0
      %v2025 = vsel %vm2020, %v1946, 0
      %v2028 = vsel %vm2020, %v1947, 0
      %v2031 = vsel %vm2020, %v1948, 0
      %v2034 = vsel %vm2020, %v1949, 0
      %v2037 = vsel %vm2020, %v1950, 0
      %v2040 = vsel %vm2020, %v1951, 0
      %v2043 = vsel %vm2020, %v1952, 0
      %v2046 = vsel %vm2020, %v1953, 0
      %v2049 = vsel %vm2020, %v1954, 0
      %v2052 = vsel %vm2020, %v1955, 0
      %v2055 = vsel %vm2020, %v1956, 0
      %v2058 = vsel %vm2020, %v1957, 0
      %v2061 = vsel %vm2020, %v1958, 0
      %v2064 = vsel %vm2020, %v1959, 0
      %v2067 = vsel %vm2020, %v1960, 0
      %v2070 = vsel %vm2020, %v1961, 0
      %v2073 = vsel %vm2020, %v1962, 0
      %v2076 = vsel %vm2020, %v1963, 0
      %v2079 = vsel %vm2020, %v1964, 0
      %v2082 = vsel %vm2020, %v1965, 0
      %v2085 = vsel %vm2020, %v1966, 0
      %v2088 = vsel %vm2020, %v1967, 0
      %v2091 = vsel %vm2020, %v1968, 0
      %v2094 = vsel %vm2020, %v1969, 0
      %v2097 = vsel %vm2020, %v1970, 0
      %v2100 = vsel %vm2020, %v1971, 0
      %v2103 = vsel %vm2020, %v1972, 0
      %v2106 = vsel %vm2020, %v1973, 0
      %v2109 = vsel %vm2020, %v1974, 0
      %v2112 = vsel %vm2020, %v1975, 0
      %v2115 = vsel %vm2020, %v1976, 0
      %vm2117 = vcmask 1043456
      %v2119 = vsel %vm2117, %v2015, 0
      %2121 = vmatprep.subr.bf16.mxu0 0
      %2122 = vmatpush1.bf16.msra.mxu0 %v2011
      %2123 = vmatprep.subr.bf16.mxu0 0
      %2124 = vmatpush1.bf16.msra.mxu0 %v2012
      %2125 = vmatprep.subr.bf16.mxu0 0
      %2126 = vmatpush1.bf16.msra.mxu0 %v2013
      %2127 = vmatprep.subr.bf16.mxu0 0
      %2128 = vmatpush1.bf16.msra.mxu0 %v2014
      %2129 = vmatprep.subr.bf16.mxu0 0
      %2130 = vmatpush1.bf16.msra.mxu0 %v2119
      %2131 = vmatprep.subr.bf16.mxu0 0
      %2132 = vmatpush1.bf16.msra.mxu0 0
      %2133 = vmatprep.subr.bf16.mxu0 0
      %2134 = vmatpush1.bf16.msra.mxu0 0
      %2135 = vmatprep.subr.bf16.mxu0 0
      %2136 = vmatpush1.bf16.msra.mxu0 0
      %2137 = vmatprep.subr.bf16.mxu0 0
      %2138 = vmatpush1.bf16.msra.mxu0 0
      %2139 = vmatprep.subr.bf16.mxu0 0
      %2140 = vmatpush1.bf16.msra.mxu0 0
      %2141 = vmatprep.subr.bf16.mxu0 0
      %2142 = vmatpush1.bf16.msra.mxu0 0
      %2143 = vmatprep.subr.bf16.mxu0 0
      %2144 = vmatpush1.bf16.msra.mxu0 0
      %2145 = vmatprep.subr.bf16.mxu0 0
      %2146 = vmatpush1.bf16.msra.mxu0 0
      %2147 = vmatprep.subr.bf16.mxu0 0
      %2148 = vmatpush1.bf16.msra.mxu0 0
      %2149 = vmatprep.subr.bf16.mxu0 0
      %2150 = vmatpush1.bf16.msra.mxu0 0
      %2151 = vmatprep.subr.bf16.mxu0 0
      %2152 = vmatpush1.bf16.msra.mxu0 0
      %2153 = vmatprep.mubr.bf16.mxu0 0
      %2154 = vmatmul.mubr.bf16.gmra.mrb[0].mxu0 %v2022
      %v2155 = vpop.f32.mrb[0].mxu0
      %v2156 = vadd.f32 %v1991, %v2155
      %v2157 = vpop.f32.mrb[0].mxu0
      %v2158 = vpop.f32.mrb[0].mxu0
      %v2159 = vadd.f32 %v1991, %v2158
      %v2160 = vpop.f32.mrb[0].mxu0
      %2161 = vmatprep.mubr.bf16.mxu0 0
      %2162 = vmatmul.mubr.bf16.gmra.mrb[0].mxu0 %v2025
      %v2163 = vpop.f32.mrb[0].mxu0
      %v2164 = vadd.f32 %v1991, %v2163
      %v2165 = vpop.f32.mrb[0].mxu0
      %v2166 = vpop.f32.mrb[0].mxu0
      %v2167 = vadd.f32 %v1991, %v2166
      %v2168 = vpop.f32.mrb[0].mxu0
      %2169 = vmatprep.mubr.bf16.mxu0 0
      %2170 = vmatmul.mubr.bf16.gmra.mrb[0].mxu0 %v2028
      %v2171 = vpop.f32.mrb[0].mxu0
      %v2172 = vadd.f32 %v1991, %v2171
      %v2173 = vpop.f32.mrb[0].mxu0
      %v2174 = vpop.f32.mrb[0].mxu0
      %v2175 = vadd.f32 %v1991, %v2174
      %v2176 = vpop.f32.mrb[0].mxu0
      %2177 = vmatprep.mubr.bf16.mxu0 0
      %2178 = vmatmul.mubr.bf16.gmra.mrb[0].mxu0 %v2031
      %v2179 = vpop.f32.mrb[0].mxu0
      %v2180 = vadd.f32 %v1991, %v2179
      %v2181 = vpop.f32.mrb[0].mxu0
      %v2182 = vpop.f32.mrb[0].mxu0
      %v2183 = vadd.f32 %v1991, %v2182
      %v2184 = vpop.f32.mrb[0].mxu0
      %2185 = vmatprep.mubr.bf16.mxu0 0
      %2186 = vmatmul.mubr.bf16.gmra.mrb[0].mxu0 %v2034
      %v2187 = vpop.f32.mrb[0].mxu0
      %v2188 = vadd.f32 %v1991, %v2187
      %v2189 = vpop.f32.mrb[0].mxu0
      %v2190 = vpop.f32.mrb[0].mxu0
      %v2191 = vadd.f32 %v1991, %v2190
      %v2192 = vpop.f32.mrb[0].mxu0
      %2193 = vmatprep.mubr.bf16.mxu0 0
      %2194 = vmatmul.mubr.bf16.gmra.mrb[0].mxu0 %v2037
      %v2195 = vpop.f32.mrb[0].mxu0
      %v2196 = vadd.f32 %v1991, %v2195
      %v2197 = vpop.f32.mrb[0].mxu0
      %v2198 = vpop.f32.mrb[0].mxu0
      %v2199 = vadd.f32 %v1991, %v2198
      %v2200 = vpop.f32.mrb[0].mxu0
      %2201 = vmatprep.mubr.bf16.mxu0 0
      %2202 = vmatmul.mubr.bf16.gmra.mrb[0].mxu0 %v2040
      %v2203 = vpop.f32.mrb[0].mxu0
      %v2204 = vadd.f32 %v1991, %v2203
      %v2205 = vpop.f32.mrb[0].mxu0
      %v2206 = vpop.f32.mrb[0].mxu0
      %v2207 = vadd.f32 %v1991, %v2206
      %v2208 = vpop.f32.mrb[0].mxu0
      %2209 = vmatprep.mubr.bf16.mxu0 0
      %2210 = vmatmul.mubr.bf16.gmra.mrb[0].mxu0 %v2043
      %v2211 = vpop.f32.mrb[0].mxu0
      %v2212 = vadd.f32 %v1991, %v2211
      %v2213 = vpop.f32.mrb[0].mxu0
      %v2214 = vpop.f32.mrb[0].mxu0
      %v2215 = vadd.f32 %v1991, %v2214
      %v2216 = vpop.f32.mrb[0].mxu0
      %2217 = vmatprep.mubr.bf16.mxu0 0
      %2218 = vmatmul.mubr.bf16.gmra.mrb[0].mxu0 %v2046
      %v2219 = vpop.f32.mrb[0].mxu0
      %v2220 = vadd.f32 %v1991, %v2219
      %v2221 = vpop.f32.mrb[0].mxu0
      %v2222 = vpop.f32.mrb[0].mxu0
      %v2223 = vadd.f32 %v1991, %v2222
      %v2224 = vpop.f32.mrb[0].mxu0
      %2225 = vmatprep.mubr.bf16.mxu0 0
      %2226 = vmatmul.mubr.bf16.gmra.mrb[0].mxu0 %v2049
      %v2227 = vpop.f32.mrb[0].mxu0
      %v2228 = vadd.f32 %v1991, %v2227
      %v2229 = vpop.f32.mrb[0].mxu0
      %v2230 = vpop.f32.mrb[0].mxu0
      %v2231 = vadd.f32 %v1991, %v2230
      %v2232 = vpop.f32.mrb[0].mxu0
      %2233 = vmatprep.mubr.bf16.mxu0 0
      %2234 = vmatmul.mubr.bf16.gmra.mrb[0].mxu0 %v2052
      %v2235 = vpop.f32.mrb[0].mxu0
      %v2236 = vadd.f32 %v1991, %v2235
      %v2237 = vpop.f32.mrb[0].mxu0
      %v2238 = vpop.f32.mrb[0].mxu0
      %v2239 = vadd.f32 %v1991, %v2238
      %v2240 = vpop.f32.mrb[0].mxu0
      %2241 = vmatprep.mubr.bf16.mxu0 0
      %2242 = vmatmul.mubr.bf16.gmra.mrb[0].mxu0 %v2055
      %v2243 = vpop.f32.mrb[0].mxu0
      %v2244 = vadd.f32 %v1991, %v2243
      %v2245 = vpop.f32.mrb[0].mxu0
      %v2246 = vpop.f32.mrb[0].mxu0
      %v2247 = vadd.f32 %v1991, %v2246
      %v2248 = vpop.f32.mrb[0].mxu0
      %2249 = vmatprep.mubr.bf16.mxu0 0
      %2250 = vmatmul.mubr.bf16.gmra.mrb[0].mxu0 %v2058
      %v2251 = vpop.f32.mrb[0].mxu0
      %v2252 = vadd.f32 %v1991, %v2251
      %v2253 = vpop.f32.mrb[0].mxu0
      %v2254 = vpop.f32.mrb[0].mxu0
      %v2255 = vadd.f32 %v1991, %v2254
      %v2256 = vpop.f32.mrb[0].mxu0
      %2257 = vmatprep.mubr.bf16.mxu0 0
      %2258 = vmatmul.mubr.bf16.gmra.mrb[0].mxu0 %v2061
      %v2259 = vpop.f32.mrb[0].mxu0
      %v2260 = vadd.f32 %v1991, %v2259
      %v2261 = vpop.f32.mrb[0].mxu0
      %v2262 = vpop.f32.mrb[0].mxu0
      %v2263 = vadd.f32 %v1991, %v2262
      %v2264 = vpop.f32.mrb[0].mxu0
      %2265 = vmatprep.mubr.bf16.mxu0 0
      %2266 = vmatmul.mubr.bf16.gmra.mrb[0].mxu0 %v2064
      %v2267 = vpop.f32.mrb[0].mxu0
      %v2268 = vadd.f32 %v1991, %v2267
      %v2269 = vpop.f32.mrb[0].mxu0
      %v2270 = vpop.f32.mrb[0].mxu0
      %v2271 = vadd.f32 %v1991, %v2270
      %v2272 = vpop.f32.mrb[0].mxu0
      %2273 = vmatprep.mubr.bf16.mxu0 0
      %2274 = vmatmul.mubr.bf16.gmra.mrb[0].mxu0 %v2067
      %v2275 = vpop.f32.mrb[0].mxu0
      %v2276 = vadd.f32 %v1991, %v2275
      %v2277 = vpop.f32.mrb[0].mxu0
      %v2278 = vpop.f32.mrb[0].mxu0
      %v2279 = vadd.f32 %v1991, %v2278
      %v2280 = vpop.f32.mrb[0].mxu0
      %2281 = vmatprep.mubr.bf16.mxu0 0
      %2282 = vmatmul.mubr.bf16.gmra.mrb[0].mxu0 %v2070
      %v2283 = vpop.f32.mrb[0].mxu0
      %v2284 = vadd.f32 %v1991, %v2283
      %v2285 = vpop.f32.mrb[0].mxu0
      %v2286 = vpop.f32.mrb[0].mxu0
      %v2287 = vadd.f32 %v1991, %v2286
      %v2288 = vpop.f32.mrb[0].mxu0
      %2289 = vmatprep.mubr.bf16.mxu0 0
      %2290 = vmatmul.mubr.bf16.gmra.mrb[0].mxu0 %v2073
      %v2291 = vpop.f32.mrb[0].mxu0
      %v2292 = vadd.f32 %v1991, %v2291
      %v2293 = vpop.f32.mrb[0].mxu0
      %v2294 = vpop.f32.mrb[0].mxu0
      %v2295 = vadd.f32 %v1991, %v2294
      %v2296 = vpop.f32.mrb[0].mxu0
      %2297 = vmatprep.mubr.bf16.mxu0 0
      %2298 = vmatmul.mubr.bf16.gmra.mrb[0].mxu0 %v2076
      %v2299 = vpop.f32.mrb[0].mxu0
      %v2300 = vadd.f32 %v1991, %v2299
      %v2301 = vpop.f32.mrb[0].mxu0
      %v2302 = vpop.f32.mrb[0].mxu0
      %v2303 = vadd.f32 %v1991, %v2302
      %v2304 = vpop.f32.mrb[0].mxu0
      %2305 = vmatprep.mubr.bf16.mxu0 0
      %2306 = vmatmul.mubr.bf16.gmra.mrb[0].mxu0 %v2079
      %v2307 = vpop.f32.mrb[0].mxu0
      %v2308 = vadd.f32 %v1991, %v2307
      %v2309 = vpop.f32.mrb[0].mxu0
      %v2310 = vpop.f32.mrb[0].mxu0
      %v2311 = vadd.f32 %v1991, %v2310
      %v2312 = vpop.f32.mrb[0].mxu0
      %2313 = vmatprep.mubr.bf16.mxu0 0
      %2314 = vmatmul.mubr.bf16.gmra.mrb[0].mxu0 %v2082
      %v2315 = vpop.f32.mrb[0].mxu0
      %v2316 = vadd.f32 %v1991, %v2315
      %v2317 = vpop.f32.mrb[0].mxu0
      %v2318 = vpop.f32.mrb[0].mxu0
      %v2319 = vadd.f32 %v1991, %v2318
      %v2320 = vpop.f32.mrb[0].mxu0
      %2321 = vmatprep.mubr.bf16.mxu0 0
      %2322 = vmatmul.mubr.bf16.gmra.mrb[0].mxu0 %v2085
      %v2323 = vpop.f32.mrb[0].mxu0
      %v2324 = vadd.f32 %v1991, %v2323
      %v2325 = vpop.f32.mrb[0].mxu0
      %v2326 = vpop.f32.mrb[0].mxu0
      %v2327 = vadd.f32 %v1991, %v2326
      %v2328 = vpop.f32.mrb[0].mxu0
      %2329 = vmatprep.mubr.bf16.mxu0 0
      %2330 = vmatmul.mubr.bf16.gmra.mrb[0].mxu0 %v2088
      %v2331 = vpop.f32.mrb[0].mxu0
      %v2332 = vadd.f32 %v1991, %v2331
      %v2333 = vpop.f32.mrb[0].mxu0
      %v2334 = vpop.f32.mrb[0].mxu0
      %v2335 = vadd.f32 %v1991, %v2334
      %v2336 = vpop.f32.mrb[0].mxu0
      %2337 = vmatprep.mubr.bf16.mxu0 0
      %2338 = vmatmul.mubr.bf16.gmra.mrb[0].mxu0 %v2091
      %v2339 = vpop.f32.mrb[0].mxu0
      %v2340 = vadd.f32 %v1991, %v2339
      %v2341 = vpop.f32.mrb[0].mxu0
      %v2342 = vpop.f32.mrb[0].mxu0
      %v2343 = vadd.f32 %v1991, %v2342
      %v2344 = vpop.f32.mrb[0].mxu0
      %2345 = vmatprep.mubr.bf16.mxu0 0
      %2346 = vmatmul.mubr.bf16.gmra.mrb[0].mxu0 %v2094
      %v2347 = vpop.f32.mrb[0].mxu0
      %v2348 = vadd.f32 %v1991, %v2347
      %v2349 = vpop.f32.mrb[0].mxu0
      %v2350 = vpop.f32.mrb[0].mxu0
      %v2351 = vadd.f32 %v1991, %v2350
      %v2352 = vpop.f32.mrb[0].mxu0
      %2353 = vmatprep.mubr.bf16.mxu0 0
      %2354 = vmatmul.mubr.bf16.gmra.mrb[0].mxu0 %v2097
      %v2355 = vpop.f32.mrb[0].mxu0
      %v2356 = vadd.f32 %v1991, %v2355
      %v2357 = vpop.f32.mrb[0].mxu0
      %v2358 = vpop.f32.mrb[0].mxu0
      %v2359 = vadd.f32 %v1991, %v2358
      %v2360 = vpop.f32.mrb[0].mxu0
      %2361 = vmatprep.mubr.bf16.mxu0 0
      %2362 = vmatmul.mubr.bf16.gmra.mrb[0].mxu0 %v2100
      %v2363 = vpop.f32.mrb[0].mxu0
      %v2364 = vadd.f32 %v1991, %v2363
      %v2365 = vpop.f32.mrb[0].mxu0
      %v2366 = vpop.f32.mrb[0].mxu0
      %v2367 = vadd.f32 %v1991, %v2366
      %v2368 = vpop.f32.mrb[0].mxu0
      %2369 = vmatprep.mubr.bf16.mxu0 0
      %2370 = vmatmul.mubr.bf16.gmra.mrb[0].mxu0 %v2103
      %v2371 = vpop.f32.mrb[0].mxu0
      %v2372 = vadd.f32 %v1991, %v2371
      %v2373 = vpop.f32.mrb[0].mxu0
      %v2374 = vpop.f32.mrb[0].mxu0
      %v2375 = vadd.f32 %v1991, %v2374
      %v2376 = vpop.f32.mrb[0].mxu0
      %2377 = vmatprep.mubr.bf16.mxu0 0
      %2378 = vmatmul.mubr.bf16.gmra.mrb[0].mxu0 %v2106
      %v2379 = vpop.f32.mrb[0].mxu0
      %v2380 = vadd.f32 %v1991, %v2379
      %v2381 = vpop.f32.mrb[0].mxu0
      %v2382 = vpop.f32.mrb[0].mxu0
      %v2383 = vadd.f32 %v1991, %v2382
      %v2384 = vpop.f32.mrb[0].mxu0
      %2385 = vmatprep.mubr.bf16.mxu0 0
      %2386 = vmatmul.mubr.bf16.gmra.mrb[0].mxu0 %v2109
      %v2387 = vpop.f32.mrb[0].mxu0
      %v2388 = vadd.f32 %v1991, %v2387
      %v2389 = vpop.f32.mrb[0].mxu0
      %v2390 = vpop.f32.mrb[0].mxu0
      %v2391 = vadd.f32 %v1991, %v2390
      %v2392 = vpop.f32.mrb[0].mxu0
      %2393 = vmatprep.mubr.bf16.mxu0 0
      %2394 = vmatmul.mubr.bf16.gmra.mrb[0].mxu0 %v2112
      %v2395 = vpop.f32.mrb[0].mxu0
      %v2396 = vadd.f32 %v1991, %v2395
      %v2397 = vpop.f32.mrb[0].mxu0
      %v2398 = vpop.f32.mrb[0].mxu0
      %v2399 = vadd.f32 %v1991, %v2398
      %v2400 = vpop.f32.mrb[0].mxu0
      %2401 = vmatprep.mubr.bf16.mxu0 0
      %2402 = vmatmul.mubr.bf16.gmra.mrb[0].mxu0 %v2115
      %v2403 = vpop.f32.mrb[0].mxu0
      %v2404 = vadd.f32 %v1991, %v2403
      %v2405 = vpop.f32.mrb[0].mxu0
      %v2406 = vpop.f32.mrb[0].mxu0
      %v2407 = vadd.f32 %v1991, %v2406
      %v2408 = vpop.f32.mrb[0].mxu0
      %2409 = vdwg.mxu0
      %vm2410 = vcmp.ge.f32.partialorder %v2156, 0.0
      %vm2411 = vcmp.ge.f32.partialorder %v2159, 0.0
      %vm2412 = vcmp.ge.f32.partialorder %v2164, 0.0
      %vm2413 = vcmp.ge.f32.partialorder %v2167, 0.0
      %vm2414 = vcmp.ge.f32.partialorder %v2172, 0.0
      %vm2415 = vcmp.ge.f32.partialorder %v2175, 0.0
      %vm2416 = vcmp.ge.f32.partialorder %v2180, 0.0
      %vm2417 = vcmp.ge.f32.partialorder %v2183, 0.0
      %vm2418 = vcmp.ge.f32.partialorder %v2188, 0.0
      %vm2419 = vcmp.ge.f32.partialorder %v2191, 0.0
      %vm2420 = vcmp.ge.f32.partialorder %v2196, 0.0
      %vm2421 = vcmp.ge.f32.partialorder %v2199, 0.0
      %vm2422 = vcmp.ge.f32.partialorder %v2204, 0.0
      %vm2423 = vcmp.ge.f32.partialorder %v2207, 0.0
      %vm2424 = vcmp.ge.f32.partialorder %v2212, 0.0
      %vm2425 = vcmp.ge.f32.partialorder %v2215, 0.0
      %vm2426 = vcmp.ge.f32.partialorder %v2220, 0.0
      %vm2427 = vcmp.ge.f32.partialorder %v2223, 0.0
      %vm2428 = vcmp.ge.f32.partialorder %v2228, 0.0
      %vm2429 = vcmp.ge.f32.partialorder %v2231, 0.0
      %vm2430 = vcmp.ge.f32.partialorder %v2236, 0.0
      %vm2431 = vcmp.ge.f32.partialorder %v2239, 0.0
      %vm2432 = vcmp.ge.f32.partialorder %v2244, 0.0
      %vm2433 = vcmp.ge.f32.partialorder %v2247, 0.0
      %vm2434 = vcmp.ge.f32.partialorder %v2252, 0.0
      %vm2435 = vcmp.ge.f32.partialorder %v2255, 0.0
      %vm2436 = vcmp.ge.f32.partialorder %v2260, 0.0
      %vm2437 = vcmp.ge.f32.partialorder %v2263, 0.0
      %vm2438 = vcmp.ge.f32.partialorder %v2268, 0.0
      %vm2439 = vcmp.ge.f32.partialorder %v2271, 0.0
      %vm2440 = vcmp.ge.f32.partialorder %v2276, 0.0
      %vm2441 = vcmp.ge.f32.partialorder %v2279, 0.0
      %vm2442 = vcmp.ge.f32.partialorder %v2284, 0.0
      %vm2443 = vcmp.ge.f32.partialorder %v2287, 0.0
      %vm2444 = vcmp.ge.f32.partialorder %v2292, 0.0
      %vm2445 = vcmp.ge.f32.partialorder %v2295, 0.0
      %vm2446 = vcmp.ge.f32.partialorder %v2300, 0.0
      %vm2447 = vcmp.ge.f32.partialorder %v2303, 0.0
      %vm2448 = vcmp.ge.f32.partialorder %v2308, 0.0
      %vm2449 = vcmp.ge.f32.partialorder %v2311, 0.0
      %vm2450 = vcmp.ge.f32.partialorder %v2316, 0.0
      %vm2451 = vcmp.ge.f32.partialorder %v2319, 0.0
      %vm2452 = vcmp.ge.f32.partialorder %v2324, 0.0
      %vm2453 = vcmp.ge.f32.partialorder %v2327, 0.0
      %vm2454 = vcmp.ge.f32.partialorder %v2332, 0.0
      %vm2455 = vcmp.ge.f32.partialorder %v2335, 0.0
      %vm2456 = vcmp.ge.f32.partialorder %v2340, 0.0
      %vm2457 = vcmp.ge.f32.partialorder %v2343, 0.0
      %vm2458 = vcmp.ge.f32.partialorder %v2348, 0.0
      %vm2459 = vcmp.ge.f32.partialorder %v2351, 0.0
      %vm2460 = vcmp.ge.f32.partialorder %v2356, 0.0
      %vm2461 = vcmp.ge.f32.partialorder %v2359, 0.0
      %vm2462 = vcmp.ge.f32.partialorder %v2364, 0.0
      %vm2463 = vcmp.ge.f32.partialorder %v2367, 0.0
      %vm2464 = vcmp.ge.f32.partialorder %v2372, 0.0
      %vm2465 = vcmp.ge.f32.partialorder %v2375, 0.0
      %vm2466 = vcmp.ge.f32.partialorder %v2380, 0.0
      %vm2467 = vcmp.ge.f32.partialorder %v2383, 0.0
      %vm2468 = vcmp.ge.f32.partialorder %v2388, 0.0
      %vm2469 = vcmp.ge.f32.partialorder %v2391, 0.0
      %vm2470 = vcmp.ge.f32.partialorder %v2396, 0.0
      %vm2471 = vcmp.ge.f32.partialorder %v2399, 0.0
      %vm2472 = vcmp.ge.f32.partialorder %v2404, 0.0
      %vm2473 = vcmp.ge.f32.partialorder %v2407, 0.0
      %v2474 = vmul.f32 %v2156, 0.2
      %v2475 = vmul.f32 %v2159, 0.2
      %v2476 = vmul.f32 %v2164, 0.2
      %v2477 = vmul.f32 %v2167, 0.2
      %v2478 = vmul.f32 %v2172, 0.2
      %v2479 = vmul.f32 %v2175, 0.2
      %v2480 = vmul.f32 %v2180, 0.2
      %v2481 = vmul.f32 %v2183, 0.2
      %v2482 = vmul.f32 %v2188, 0.2
      %v2483 = vmul.f32 %v2191, 0.2
      %v2484 = vmul.f32 %v2196, 0.2
      %v2485 = vmul.f32 %v2199, 0.2
      %v2486 = vmul.f32 %v2204, 0.2
      %v2487 = vmul.f32 %v2207, 0.2
      %v2488 = vmul.f32 %v2212, 0.2
      %v2489 = vmul.f32 %v2215, 0.2
      %v2490 = vmul.f32 %v2220, 0.2
      %v2491 = vmul.f32 %v2223, 0.2
      %v2492 = vmul.f32 %v2228, 0.2
      %v2493 = vmul.f32 %v2231, 0.2
      %v2494 = vmul.f32 %v2236, 0.2
      %v2495 = vmul.f32 %v2239, 0.2
      %v2496 = vmul.f32 %v2244, 0.2
      %v2497 = vmul.f32 %v2247, 0.2
      %v2498 = vmul.f32 %v2252, 0.2
      %v2499 = vmul.f32 %v2255, 0.2
      %v2500 = vmul.f32 %v2260, 0.2
      %v2501 = vmul.f32 %v2263, 0.2
      %v2502 = vmul.f32 %v2268, 0.2
      %v2503 = vmul.f32 %v2271, 0.2
      %v2504 = vmul.f32 %v2276, 0.2
      %v2505 = vmul.f32 %v2279, 0.2
      %v2506 = vmul.f32 %v2284, 0.2
      %v2507 = vmul.f32 %v2287, 0.2
      %v2508 = vmul.f32 %v2292, 0.2
      %v2509 = vmul.f32 %v2295, 0.2
      %v2510 = vmul.f32 %v2300, 0.2
      %v2511 = vmul.f32 %v2303, 0.2
      %v2512 = vmul.f32 %v2308, 0.2
      %v2513 = vmul.f32 %v2311, 0.2
      %v2514 = vmul.f32 %v2316, 0.2
      %v2515 = vmul.f32 %v2319, 0.2
      %v2516 = vmul.f32 %v2324, 0.2
      %v2517 = vmul.f32 %v2327, 0.2
      %v2518 = vmul.f32 %v2332, 0.2
      %v2519 = vmul.f32 %v2335, 0.2
      %v2520 = vmul.f32 %v2340, 0.2
      %v2521 = vmul.f32 %v2343, 0.2
      %v2522 = vmul.f32 %v2348, 0.2
      %v2523 = vmul.f32 %v2351, 0.2
      %v2524 = vmul.f32 %v2356, 0.2
      %v2525 = vmul.f32 %v2359, 0.2
      %v2526 = vmul.f32 %v2364, 0.2
      %v2527 = vmul.f32 %v2367, 0.2
      %v2528 = vmul.f32 %v2372, 0.2
      %v2529 = vmul.f32 %v2375, 0.2
      %v2530 = vmul.f32 %v2380, 0.2
      %v2531 = vmul.f32 %v2383, 0.2
      %v2532 = vmul.f32 %v2388, 0.2
      %v2533 = vmul.f32 %v2391, 0.2
      %v2534 = vmul.f32 %v2396, 0.2
      %v2535 = vmul.f32 %v2399, 0.2
      %v2536 = vmul.f32 %v2404, 0.2
      %v2537 = vmul.f32 %v2407, 0.2
      %v2538 = vsel %vm2410, %v2156, %v2474
      %v2539 = vsel %vm2411, %v2159, %v2475
      %v2540 = vsel %vm2412, %v2164, %v2476
      %v2541 = vsel %vm2413, %v2167, %v2477
      %v2542 = vsel %vm2414, %v2172, %v2478
      %v2543 = vsel %vm2415, %v2175, %v2479
      %v2544 = vsel %vm2416, %v2180, %v2480
      %v2545 = vsel %vm2417, %v2183, %v2481
      %v2546 = vsel %vm2418, %v2188, %v2482
      %v2547 = vsel %vm2419, %v2191, %v2483
      %v2548 = vsel %vm2420, %v2196, %v2484
      %v2549 = vsel %vm2421, %v2199, %v2485
      %v2550 = vsel %vm2422, %v2204, %v2486
      %v2551 = vsel %vm2423, %v2207, %v2487
      %v2552 = vsel %vm2424, %v2212, %v2488
      %v2553 = vsel %vm2425, %v2215, %v2489
      %v2554 = vsel %vm2426, %v2220, %v2490
      %v2555 = vsel %vm2427, %v2223, %v2491
      %v2556 = vsel %vm2428, %v2228, %v2492
      %v2557 = vsel %vm2429, %v2231, %v2493
      %v2558 = vsel %vm2430, %v2236, %v2494
      %v2559 = vsel %vm2431, %v2239, %v2495
      %v2560 = vsel %vm2432, %v2244, %v2496
      %v2561 = vsel %vm2433, %v2247, %v2497
      %v2562 = vsel %vm2434, %v2252, %v2498
      %v2563 = vsel %vm2435, %v2255, %v2499
      %v2564 = vsel %vm2436, %v2260, %v2500
      %v2565 = vsel %vm2437, %v2263, %v2501
      %v2566 = vsel %vm2438, %v2268, %v2502
      %v2567 = vsel %vm2439, %v2271, %v2503
      %v2568 = vsel %vm2440, %v2276, %v2504
      %v2569 = vsel %vm2441, %v2279, %v2505
      %v2570 = vsel %vm2442, %v2284, %v2506
      %v2571 = vsel %vm2443, %v2287, %v2507
      %v2572 = vsel %vm2444, %v2292, %v2508
      %v2573 = vsel %vm2445, %v2295, %v2509
      %v2574 = vsel %vm2446, %v2300, %v2510
      %v2575 = vsel %vm2447, %v2303, %v2511
      %v2576 = vsel %vm2448, %v2308, %v2512
      %v2577 = vsel %vm2449, %v2311, %v2513
      %v2578 = vsel %vm2450, %v2316, %v2514
      %v2579 = vsel %vm2451, %v2319, %v2515
      %v2580 = vsel %vm2452, %v2324, %v2516
      %v2581 = vsel %vm2453, %v2327, %v2517
      %v2582 = vsel %vm2454, %v2332, %v2518
      %v2583 = vsel %vm2455, %v2335, %v2519
      %v2584 = vsel %vm2456, %v2340, %v2520
      %v2585 = vsel %vm2457, %v2343, %v2521
      %v2586 = vsel %vm2458, %v2348, %v2522
      %v2587 = vsel %vm2459, %v2351, %v2523
      %v2588 = vsel %vm2460, %v2356, %v2524
      %v2589 = vsel %vm2461, %v2359, %v2525
      %v2590 = vsel %vm2462, %v2364, %v2526
      %v2591 = vsel %vm2463, %v2367, %v2527
      %v2592 = vsel %vm2464, %v2372, %v2528
      %v2593 = vsel %vm2465, %v2375, %v2529
      %v2594 = vsel %vm2466, %v2380, %v2530
      %v2595 = vsel %vm2467, %v2383, %v2531
      %v2596 = vsel %vm2468, %v2388, %v2532
      %v2597 = vsel %vm2469, %v2391, %v2533
      %v2598 = vsel %vm2470, %v2396, %v2534
      %v2599 = vsel %vm2471, %v2399, %v2535
      %v2600 = vsel %vm2472, %v2404, %v2536
      %v2601 = vsel %vm2473, %v2407, %v2537
      %v2602 = vpack.c.bf16 %v2539, %v2538
      %v2603 = vpack.c.bf16 %v2541, %v2540
      %v2604 = vpack.c.bf16 %v2543, %v2542
      %v2605 = vpack.c.bf16 %v2545, %v2544
      %v2606 = vpack.c.bf16 %v2547, %v2546
      %v2607 = vpack.c.bf16 %v2549, %v2548
      %v2608 = vpack.c.bf16 %v2551, %v2550
      %v2609 = vpack.c.bf16 %v2553, %v2552
      %v2610 = vpack.c.bf16 %v2555, %v2554
      %v2611 = vpack.c.bf16 %v2557, %v2556
      %v2612 = vpack.c.bf16 %v2559, %v2558
      %v2613 = vpack.c.bf16 %v2561, %v2560
      %v2614 = vpack.c.bf16 %v2563, %v2562
      %v2615 = vpack.c.bf16 %v2565, %v2564
      %v2616 = vpack.c.bf16 %v2567, %v2566
      %v2617 = vpack.c.bf16 %v2569, %v2568
      %v2618 = vpack.c.bf16 %v2571, %v2570
      %v2619 = vpack.c.bf16 %v2573, %v2572
      %v2620 = vpack.c.bf16 %v2575, %v2574
      %v2621 = vpack.c.bf16 %v2577, %v2576
      %v2622 = vpack.c.bf16 %v2579, %v2578
      %v2623 = vpack.c.bf16 %v2581, %v2580
      %v2624 = vpack.c.bf16 %v2583, %v2582
      %v2625 = vpack.c.bf16 %v2585, %v2584
      %v2626 = vpack.c.bf16 %v2587, %v2586
      %v2627 = vpack.c.bf16 %v2589, %v2588
      %v2628 = vpack.c.bf16 %v2591, %v2590
      %v2629 = vpack.c.bf16 %v2593, %v2592
      %v2630 = vpack.c.bf16 %v2595, %v2594
      %v2631 = vpack.c.bf16 %v2597, %v2596
      %v2632 = vpack.c.bf16 %v2599, %v2598
      %v2633 = vpack.c.bf16 %v2601, %v2600
      %v2666 = vunpack.c.l.b16 %v2602
      %v2667 = vunpack.c.h.b16 %v2602
      %v2668 = vunpack.c.l.b16 %v2603
      %v2669 = vunpack.c.h.b16 %v2603
      %v2670 = vunpack.c.l.b16 %v2604
      %v2671 = vunpack.c.h.b16 %v2604
      %v2672 = vunpack.c.l.b16 %v2605
      %v2673 = vunpack.c.h.b16 %v2605
      %v2674 = vunpack.c.l.b16 %v2606
      %v2675 = vunpack.c.h.b16 %v2606
      %v2676 = vunpack.c.l.b16 %v2607
      %v2677 = vunpack.c.h.b16 %v2607
      %v2678 = vunpack.c.l.b16 %v2608
      %v2679 = vunpack.c.h.b16 %v2608
      %v2680 = vunpack.c.l.b16 %v2609
      %v2681 = vunpack.c.h.b16 %v2609
      %v2682 = vunpack.c.l.b16 %v2610
      %v2683 = vunpack.c.h.b16 %v2610
      %v2684 = vunpack.c.l.b16 %v2611
      %v2685 = vunpack.c.h.b16 %v2611
      %v2686 = vunpack.c.l.b16 %v2612
      %v2687 = vunpack.c.h.b16 %v2612
      %v2688 = vunpack.c.l.b16 %v2613
      %v2689 = vunpack.c.h.b16 %v2613
      %v2690 = vunpack.c.l.b16 %v2614
      %v2691 = vunpack.c.h.b16 %v2614
      %v2692 = vunpack.c.l.b16 %v2615
      %v2693 = vunpack.c.h.b16 %v2615
      %v2694 = vunpack.c.l.b16 %v2616
      %v2695 = vunpack.c.h.b16 %v2616
      %v2696 = vunpack.c.l.b16 %v2617
      %v2697 = vunpack.c.h.b16 %v2617
      %v2698 = vunpack.c.l.b16 %v2618
      %v2699 = vunpack.c.h.b16 %v2618
      %v2700 = vunpack.c.l.b16 %v2619
      %v2701 = vunpack.c.h.b16 %v2619
      %v2702 = vunpack.c.l.b16 %v2620
      %v2703 = vunpack.c.h.b16 %v2620
      %v2704 = vunpack.c.l.b16 %v2621
      %v2705 = vunpack.c.h.b16 %v2621
      %v2706 = vunpack.c.l.b16 %v2622
      %v2707 = vunpack.c.h.b16 %v2622
      %v2708 = vunpack.c.l.b16 %v2623
      %v2709 = vunpack.c.h.b16 %v2623
      %v2710 = vunpack.c.l.b16 %v2624
      %v2711 = vunpack.c.h.b16 %v2624
      %v2712 = vunpack.c.l.b16 %v2625
      %v2713 = vunpack.c.h.b16 %v2625
      %v2714 = vunpack.c.l.b16 %v2626
      %v2715 = vunpack.c.h.b16 %v2626
      %v2716 = vunpack.c.l.b16 %v2627
      %v2717 = vunpack.c.h.b16 %v2627
      %v2718 = vunpack.c.l.b16 %v2628
      %v2719 = vunpack.c.h.b16 %v2628
      %v2720 = vunpack.c.l.b16 %v2629
      %v2721 = vunpack.c.h.b16 %v2629
      %v2722 = vunpack.c.l.b16 %v2630
      %v2723 = vunpack.c.h.b16 %v2630
      %v2724 = vunpack.c.l.b16 %v2631
      %v2725 = vunpack.c.h.b16 %v2631
      %v2726 = vunpack.c.l.b16 %v2632
      %v2727 = vunpack.c.h.b16 %v2632
      %v2728 = vunpack.c.l.b16 %v2633
      %v2729 = vunpack.c.h.b16 %v2633
      %v2730 = vpack.c.b16 %v2666, %v2666
      %v2731 = vpack.c.b16 %v2667, %v2667
      %v2732 = vpack.c.b16 %v2668, %v2668
      %v2733 = vpack.c.b16 %v2669, %v2669
      %v2734 = vpack.c.b16 %v2670, %v2670
      %v2735 = vpack.c.b16 %v2671, %v2671
      %v2736 = vpack.c.b16 %v2672, %v2672
      %v2737 = vpack.c.b16 %v2673, %v2673
      %v2738 = vpack.c.b16 %v2674, %v2674
      %v2739 = vpack.c.b16 %v2675, %v2675
      %v2740 = vpack.c.b16 %v2676, %v2676
      %v2741 = vpack.c.b16 %v2677, %v2677
      %v2742 = vpack.c.b16 %v2678, %v2678
      %v2743 = vpack.c.b16 %v2679, %v2679
      %v2744 = vpack.c.b16 %v2680, %v2680
      %v2745 = vpack.c.b16 %v2681, %v2681
      %v2746 = vpack.c.b16 %v2682, %v2682
      %v2747 = vpack.c.b16 %v2683, %v2683
      %v2748 = vpack.c.b16 %v2684, %v2684
      %v2749 = vpack.c.b16 %v2685, %v2685
      %v2750 = vpack.c.b16 %v2686, %v2686
      %v2751 = vpack.c.b16 %v2687, %v2687
      %v2752 = vpack.c.b16 %v2688, %v2688
      %v2753 = vpack.c.b16 %v2689, %v2689
      %v2754 = vpack.c.b16 %v2690, %v2690
      %v2755 = vpack.c.b16 %v2691, %v2691
      %v2756 = vpack.c.b16 %v2692, %v2692
      %v2757 = vpack.c.b16 %v2693, %v2693
      %v2758 = vpack.c.b16 %v2694, %v2694
      %v2759 = vpack.c.b16 %v2695, %v2695
      %v2760 = vpack.c.b16 %v2696, %v2696
      %v2761 = vpack.c.b16 %v2697, %v2697
      %v2762 = vpack.c.b16 %v2698, %v2698
      %v2763 = vpack.c.b16 %v2699, %v2699
      %v2764 = vpack.c.b16 %v2700, %v2700
      %v2765 = vpack.c.b16 %v2701, %v2701
      %v2766 = vpack.c.b16 %v2702, %v2702
      %v2767 = vpack.c.b16 %v2703, %v2703
      %v2768 = vpack.c.b16 %v2704, %v2704
      %v2769 = vpack.c.b16 %v2705, %v2705
      %v2770 = vpack.c.b16 %v2706, %v2706
      %v2771 = vpack.c.b16 %v2707, %v2707
      %v2772 = vpack.c.b16 %v2708, %v2708
      %v2773 = vpack.c.b16 %v2709, %v2709
      %v2774 = vpack.c.b16 %v2710, %v2710
      %v2775 = vpack.c.b16 %v2711, %v2711
      %v2776 = vpack.c.b16 %v2712, %v2712
      %v2777 = vpack.c.b16 %v2713, %v2713
      %v2778 = vpack.c.b16 %v2714, %v2714
      %v2779 = vpack.c.b16 %v2715, %v2715
      %v2780 = vpack.c.b16 %v2716, %v2716
      %v2781 = vpack.c.b16 %v2717, %v2717
      %v2782 = vpack.c.b16 %v2718, %v2718
      %v2783 = vpack.c.b16 %v2719, %v2719
      %v2784 = vpack.c.b16 %v2720, %v2720
      %v2785 = vpack.c.b16 %v2721, %v2721
      %v2786 = vpack.c.b16 %v2722, %v2722
      %v2787 = vpack.c.b16 %v2723, %v2723
      %v2788 = vpack.c.b16 %v2724, %v2724
      %v2789 = vpack.c.b16 %v2725, %v2725
      %v2790 = vpack.c.b16 %v2726, %v2726
      %v2791 = vpack.c.b16 %v2727, %v2727
      %v2792 = vpack.c.b16 %v2728, %v2728
      %v2793 = vpack.c.b16 %v2729, %v2729
      %2858 = vst [vmem:[%s201] sm:$0xf] %v2730
      %2859 = vst [vmem:[%s201 + $0x4] sm:$0xf] %v2731
      %2860 = vst [vmem:[%s201 + $0x8] sm:$0xf] %v2732
      %2861 = vst [vmem:[%s201 + $0xc] sm:$0xf] %v2733
      %2862 = vst [vmem:[%s201 + $0x10] sm:$0xf] %v2734
      %2863 = vst [vmem:[%s201 + $0x14] sm:$0xf] %v2735
      %2864 = vst [vmem:[%s201 + $0x18] sm:$0xf] %v2736
      %2865 = vst [vmem:[%s201 + $0x1c] sm:$0xf] %v2737
      %2866 = vst [vmem:[%s201 + $0x20] sm:$0xf] %v2738
      %2867 = vst [vmem:[%s201 + $0x24] sm:$0xf] %v2739
      %2868 = vst [vmem:[%s201 + $0x28] sm:$0xf] %v2740
      %2869 = vst [vmem:[%s201 + $0x2c] sm:$0xf] %v2741
      %2870 = vst [vmem:[%s201 + $0x30] sm:$0xf] %v2742
      %2871 = vst [vmem:[%s201 + $0x34] sm:$0xf] %v2743
      %2872 = vst [vmem:[%s201 + $0x38] sm:$0xf] %v2744
      %2873 = vst [vmem:[%s201 + $0x3c] sm:$0xf] %v2745
      %2874 = vst [vmem:[%s201 + $0x40] sm:$0xf] %v2746
      %2875 = vst [vmem:[%s201 + $0x44] sm:$0xf] %v2747
      %2876 = vst [vmem:[%s201 + $0x48] sm:$0xf] %v2748
      %2877 = vst [vmem:[%s201 + $0x4c] sm:$0xf] %v2749
      %2878 = vst [vmem:[%s201 + $0x50] sm:$0xf] %v2750
      %2879 = vst [vmem:[%s201 + $0x54] sm:$0xf] %v2751
      %2880 = vst [vmem:[%s201 + $0x58] sm:$0xf] %v2752
      %2881 = vst [vmem:[%s201 + $0x5c] sm:$0xf] %v2753
      %2882 = vst [vmem:[%s201 + $0x60] sm:$0xf] %v2754
      %2883 = vst [vmem:[%s201 + $0x64] sm:$0xf] %v2755
      %2884 = vst [vmem:[%s201 + $0x68] sm:$0xf] %v2756
      %2885 = vst [vmem:[%s201 + $0x6c] sm:$0xf] %v2757
      %2886 = vst [vmem:[%s201 + $0x70] sm:$0xf] %v2758
      %2887 = vst [vmem:[%s201 + $0x74] sm:$0xf] %v2759
      %2888 = vst [vmem:[%s201 + $0x78] sm:$0xf] %v2760
      %2889 = vst [vmem:[%s201 + $0x7c] sm:$0xf] %v2761
      %2890 = vst [vmem:[%s201 + $0x80] sm:$0xf] %v2762
      %2891 = vst [vmem:[%s201 + $0x84] sm:$0xf] %v2763
      %2892 = vst [vmem:[%s201 + $0x88] sm:$0xf] %v2764
      %2893 = vst [vmem:[%s201 + $0x8c] sm:$0xf] %v2765
      %2894 = vst [vmem:[%s201 + $0x90] sm:$0xf] %v2766
      %2895 = vst [vmem:[%s201 + $0x94] sm:$0xf] %v2767
      %2896 = vst [vmem:[%s201 + $0x98] sm:$0xf] %v2768
      %2897 = vst [vmem:[%s201 + $0x9c] sm:$0xf] %v2769
      %2898 = vst [vmem:[%s201 + $0xa0] sm:$0xf] %v2770
      %2899 = vst [vmem:[%s201 + $0xa4] sm:$0xf] %v2771
      %2900 = vst [vmem:[%s201 + $0xa8] sm:$0xf] %v2772
      %2901 = vst [vmem:[%s201 + $0xac] sm:$0xf] %v2773
      %2902 = vst [vmem:[%s201 + $0xb0] sm:$0xf] %v2774
      %2903 = vst [vmem:[%s201 + $0xb4] sm:$0xf] %v2775
      %2904 = vst [vmem:[%s201 + $0xb8] sm:$0xf] %v2776
      %2905 = vst [vmem:[%s201 + $0xbc] sm:$0xf] %v2777
      %2906 = vst [vmem:[%s201 + $0xc0] sm:$0xf] %v2778
      %2907 = vst [vmem:[%s201 + $0xc4] sm:$0xf] %v2779
      %2908 = vst [vmem:[%s201 + $0xc8] sm:$0xf] %v2780
      %2909 = vst [vmem:[%s201 + $0xcc] sm:$0xf] %v2781
      %2910 = vst [vmem:[%s201 + $0xd0] sm:$0xf] %v2782
      %2911 = vst [vmem:[%s201 + $0xd4] sm:$0xf] %v2783
      %2912 = vst [vmem:[%s201 + $0xd8] sm:$0xf] %v2784
      %2913 = vst [vmem:[%s201 + $0xdc] sm:$0xf] %v2785
      %2914 = vst [vmem:[%s201 + $0xe0] sm:$0xf] %v2786
      %2915 = vst [vmem:[%s201 + $0xe4] sm:$0xf] %v2787
      %2916 = vst [vmem:[%s201 + $0xe8] sm:$0xf] %v2788
      %2917 = vst [vmem:[%s201 + $0xec] sm:$0xf] %v2789
      %2918 = vst [vmem:[%s201 + $0xf0] sm:$0xf] %v2790
      %2919 = vst [vmem:[%s201 + $0xf4] sm:$0xf] %v2791
      %2920 = vst [vmem:[%s201 + $0xf8] sm:$0xf] %v2792
      %2921 = vst [vmem:[%s201 + $0xfc] sm:$0xf] %v2793
      %s2922 = smul.u32 64, %s19
      %p2923 = scmp.lt.s32.totalorder %s2922, 191
      %s2924 = scalar_select %p2923, %s2922, 191
      %p2925 = scmp.lt.s32.totalorder %s18, 0
      %s2926 = scalar_select %p2925, %s18, 0
      %s2927 = sadd.s32 %s2926, %s2924
      %s2928 = smul.addr %s2927, 4
      %s2929 = scalar_lea.vmem %s3, %s2928
      // Predicated region
      $region33: #{a_call__.1} parent=31 // pred_check
        %p2930 = pneg %p119
      $region34: #{a_call__.1} parent=31 // pred_check_branch
        %2932 = sbr.rel (%p2930) target = $region36
      $region35: #{a_call__.1} parent=31 // pred_region
        %s2933 = smul.u32 64, %s19
      $region36: #{a_call__.1} parent=31 // pred_fallthru
        _
    $region32: #{a_call__.1} parent=5 // pred_fallthru
      _
    %p2934 = scmp.le.s32.totalorder 2, %s9
    // Predicated region
    $region37: #{a_call__.1} parent=5 // pred_check
      %p2935 = pneg %p2934
    $region38: #{a_call__.1} parent=5 // pred_check_branch
      %2937 = sbr.rel (%p2935) target = $region40
    $region39: #{a_call__.1} parent=5 // pred_region
      %s2938 = ssub.s32 %s9, 2
      // Predicated region
      $region41: #{a_call__.1} parent=39 // pred_check
        %p2939 = pneg %p125
      $region42: #{a_call__.1} parent=39 // pred_check_branch
        %2941 = sbr.rel (%p2939) target = $region44
      $region43: #{a_call__.1} parent=39 // pred_region
        %s2942 = smul.u32 64, %s21
        %p2943 = scmp.lt.s32.totalorder %s2942, 191
        %s2944 = scalar_select %p2943, %s2942, 191
        %p2945 = scmp.lt.s32.totalorder %s20, 0
        %s2946 = scalar_select %p2945, %s20, 0
        %s2947 = sadd.s32 %s2946, %s2944
        %s2948 = smul.addr %s2947, 4
        %s2949 = scalar_lea.vmem %s3, %s2948
      $region44: #{a_call__.1} parent=39 // pred_fallthru
        _
    $region40: #{a_call__.1} parent=5 // pred_fallthru
      _
  $region6: #{a_call__.1} parent=0 // loop_footer
    %s13 = sadd.s32 1, %s9
  $region7: #{a_call__.1} parent=0 // loop_footer_branch
    %8 = sbr.rel target = $region3
  $region8: #{a_call__.1} parent=0 // loop_exit
    _

</llo_original>
